<compile_context>
chip_gen: v5e
topology: v5e:2x2
jax: 0.10.0
libtpu: 0.0.40
codegen_flags: <defaults>
</compile_context>

<pallas_src>
import numpy as np
import jax
import jax.numpy as jnp
from jax.experimental import pallas as pl
from jax.experimental.pallas import tpu as pltpu


# ------------------------- host-side parameter packing -----------------------

def _pack_conv_khbanded(w, b, W, cin_pad, dtype=jnp.bfloat16):
    """Pack a (3,3,Cin,Cout) conv weight into 3 per-kh banded matrices.

    Activations are laid out as (rows = batch*H, lanes = W*cin_pad).  For each
    kh, the 3x3 'same' conv over W (W-direction zero padding folded into the
    band) is a single matmul (BH, W*cin_pad) @ (W*cin_pad, W*Cout); the full
    conv is the sum over kh applied to the H-shifted activation.
    """
    w_np = np.asarray(w, np.float32)                       # (3, 3, Cin, Cout)
    Cin, Cout = int(w_np.shape[2]), int(w_np.shape[3])
    assert cin_pad >= Cin
    wb = np.zeros((3, W * cin_pad, W * Cout), np.float32)
    for kh in range(3):
        for kw in range(3):
            for wo in range(W):
                wi = wo + kw - 1                           # input column of this tap
                if 0 <= wi < W:
                    wb[kh,
                       wi * cin_pad:wi * cin_pad + Cin,
                       wo * Cout:(wo + 1) * Cout] = w_np[kh, kw]
    b_np = np.asarray(b, np.float32)
    b_row = jnp.asarray(np.tile(b_np, W).reshape(1, W * Cout), jnp.float32)
    return jnp.asarray(wb, dtype), b_row


def _shift_mats(B, H, dtype=jnp.bfloat16):
    """0/1 row-shift matrices implementing 'same' padding along H, per sample
    (no leakage across the B samples folded into the matmul M dimension)."""
    BH = B * H
    sdn = np.zeros((BH, BH), np.float32)                   # row i <- row i-1  (x[h-1])
    sup = np.zeros((BH, BH), np.float32)                   # row i <- row i+1  (x[h+1])
    for i in range(BH):
        if i % H != 0:
            sdn[i, i - 1] = 1.0
        if i % H != H - 1:
            sup[i, i + 1] = 1.0
    return jnp.asarray(sdn, dtype), jnp.asarray(sup, dtype)


def _pool_mats(B, H, W, C, dtype=jnp.bfloat16):
    """AvgPool2d(kernel=2, stride=2, padding=0, ceil_mode=True) as two matmuls.

    ph: (B*Ho, B*H) block-diagonal row pooling (per sample), pw: (W*C, Wo*C)
    lane pooling.  The 1/count divisor (PyTorch's divisor for boundary-clipped
    windows with padding=0) is folded in; 0.5 / 1.0 are exact in bf16.
    """
    Ho = -(-H // 2)
    Wo = -(-W // 2)
    ph = np.zeros((B * Ho, B * H), np.float32)
    for bb in range(B):
        for ho in range(Ho):
            hs = [h for h in (2 * ho, 2 * ho + 1) if h < H]
            for h in hs:
                ph[bb * Ho + ho, bb * H + h] = 1.0 / len(hs)
    pw = np.zeros((W * C, Wo * C), np.float32)
    for wo in range(Wo):
        ws = [w for w in (2 * wo, 2 * wo + 1) if w < W]
        for w in ws:
            for c in range(C):
                pw[w * C + c, wo * C + c] = 1.0 / len(ws)
    return jnp.asarray(ph, dtype), jnp.asarray(pw, dtype), Ho, Wo


def pack_encoder(params, input_channels, H, W, batch_per_step, cin_pad0):
    """Build the static op plan + packed kernel operands (host-side, once)."""
    plan, packed = [], []
    shift_cache = {}
    curH, curW = H, W
    lane_c = cin_pad0                 # channel count in the lane layout (padded)
    real_c = input_channels           # logical channel count
    for i, block in enumerate(params):
        if i != 0:
            ph, pw, Ho, Wo = _pool_mats(batch_per_step, curH, curW, lane_c)
            plan.append("pool")
            packed += [ph, pw]
            curH, curW = Ho, Wo
        for (w, b) in block:
            Cin, Cout = int(w.shape[2]), int(w.shape[3])
            assert Cin == real_c
            wb, brow = _pack_conv_khbanded(w, b, curW, lane_c)
            key = (batch_per_step, curH)
            if key not in shift_cache:
                shift_cache[key] = _shift_mats(batch_per_step, curH)
            sdn, sup = shift_cache[key]
            plan.append("conv")
            packed += [wb, brow, sdn, sup]
            real_c = Cout
            lane_c = Cout
    return tuple(plan), packed, (curH, curW, lane_c)


# ------------------------------- fused kernel --------------------------------

def _make_encoder_kernel(plan):
    """Kernel computing the whole encoder for one grid step (B folded samples)."""
    n_ops = len(plan)

    def kernel(*refs):
        x_ref, o_ref = refs[0], refs[-1]
        prm = refs[1:-1]
        h = x_ref[...].astype(jnp.bfloat16)          # (B*H, W*C) bf16, stays in VMEM
        p = 0
        for idx, op in enumerate(plan):
            last = idx == n_ops - 1
            if op == "conv":
                wb_ref, b_ref, sdn_ref, sup_ref = prm[p], prm[p + 1], prm[p + 2], prm[p + 3]
                p += 4
                # 'same' padding along H via 0/1 shift matmuls (all-MXU, no
                # sublane concat/roll, per-sample boundaries handled by zeros).
                h_dn = jnp.dot(sdn_ref[...], h,
                               preferred_element_type=jnp.float32).astype(jnp.bfloat16)
                h_up = jnp.dot(sup_ref[...], h,
                               preferred_element_type=jnp.float32).astype(jnp.bfloat16)
                # 3 per-kh banded matmuls, f32 accumulation.
                acc = jnp.dot(h_dn, wb_ref[0], preferred_element_type=jnp.float32)
                acc += jnp.dot(h, wb_ref[1], preferred_element_type=jnp.float32)
                acc += jnp.dot(h_up, wb_ref[2], preferred_element_type=jnp.float32)
                a = jnp.maximum(acc + b_ref[...], 0.0)          # f32 bias + ReLU (VPU)
                h = a if last else a.astype(jnp.bfloat16)       # carry bf16 between layers
            else:                                               # "pool"
                ph_ref, pw_ref = prm[p], prm[p + 1]
                p += 2
                rows = jnp.dot(ph_ref[...], h,
                               preferred_element_type=jnp.float32).astype(jnp.bfloat16)
                h = jnp.dot(rows, pw_ref[...],
                            preferred_element_type=jnp.float32).astype(jnp.bfloat16)
        o_ref[...] = h.astype(o_ref.dtype)                      # lane-dense full vst

    return kernel


# --------------------------------- wrapper ------------------------------------

def _grid_steps_for(N):
    """>=2 grid points on dual-TensorCore chips (v7x) so both cores get work;
    a single step (max MXU M-fill, no per-step overhead) on v5e/v6e."""
    kind = ""
    try:
        kind = jax.devices()[0].device_kind.lower()
    except Exception:
        pass
    dual_tc = ("v7" in kind) or ("7x" in kind)
    return 2 if (dual_tc and N >= 2 and N % 2 == 0) else 1


def _pad_cin(C0, W):
    """Smallest padded channel count so the input slab lane width is a multiple
    of 128 (full-lane loads); falls back to no padding if none is found."""
    c = C0
    while (W * c) % 128 != 0 and c < C0 + 128:
        c += 1
    return c if (W * c) % 128 == 0 else C0


def encoder_forward(x_nchw, params, input_channels):
    """Matches Encoder.forward.  Input/output in PyTorch NCHW layout."""
    N, C0, H, W = map(int, x_nchw.shape)
    assert C0 == input_channels
    steps = _grid_steps_for(N)
    B = N // steps                                   # samples folded per grid step
    cin_pad = _pad_cin(C0, W)

    plan, packed, (Hf, Wf, Cf) = pack_encoder(params, input_channels, H, W, B, cin_pad)

    # NCHW -> lane-dense (N*H, W*Cpad) slab (host-side glue, outside the kernel);
    # zero channel padding makes every load a full 128-lane vld.
    x = jnp.pad(x_nchw, ((0, 0), (0, cin_pad - C0), (0, 0), (0, 0)))
    x = jnp.transpose(x, (0, 2, 3, 1)).reshape(N * H, W * cin_pad)

    in_specs = [pl.BlockSpec((B * H, W * cin_pad), lambda s: (s, 0))]
    for a in packed:   # grid-invariant operands (weights, biases, shift/pool mats)
        in_specs.append(pl.BlockSpec(a.shape, lambda s, _r=a.ndim: (0,) * _r))
    # TODO(synk): for large W (real p2sam resolutions), mark the weight specs
    # pipeline_mode=pl.Buffered(1) and split the O(W^2) banded weights per-kw so
    # they stay inside v7x's 64 MiB VMEM.

    out = pl.pallas_call(
        _make_encoder_kernel(plan),
        out_shape=jax.ShapeDtypeStruct((N * Hf, Wf * Cf), x_nchw.dtype),
        grid=(steps,),
        in_specs=in_specs,
        out_specs=pl.BlockSpec((B * Hf, Wf * Cf), lambda s: (s, 0)),
        compiler_params=pltpu.CompilerParams(
            dimension_semantics=("parallel",),
            vmem_limit_bytes=32 * 1024 * 1024),
    )(x, *packed)

    return out.reshape(N, Hf, Wf, Cf).transpose(0, 3, 1, 2)     # -> NCHW


# ---------------------------- parameters / driver -----------------------------

def make_encoder_params(key, input_channels, num_filters, no_convs_per_block):
    """Deterministic He-normal init (stand-in for init_weights).

    Weight layout here is (3, 3, Cin, Cout); real PyTorch Conv2d checkpoints are
    (Cout, Cin, 3, 3) and must be transposed (3,3,Cin,Cout) before packing.
    """
    params = []
    in_c = input_channels
    for out_c in num_filters:
        block = []
        cin = in_c
        for _ in range(no_convs_per_block):
            key, kw = jax.random.split(key)
            fan_in = cin * 3 * 3
            w = (jax.random.normal(kw, (3, 3, cin, out_c), jnp.float32)
                 * np.sqrt(2.0 / fan_in))
            b = jnp.zeros((out_c,), jnp.float32)
            block.append((w, b))
            cin = out_c
        params.append(block)
        in_c = out_c
    return params


if __name__ == "__main__":
    input_channels = 4
    num_filters = [8, 16]
    no_convs_per_block = 2

    key = jax.random.PRNGKey(0)
    kx, kp = jax.random.split(key)
    x = jax.random.normal(kx, (2, input_channels, 16, 16), jnp.float32)   # NCHW

    params = make_encoder_params(kp, input_channels, num_filters,
                                 no_convs_per_block)

    y = encoder_forward(x, params, input_channels)
    y = jax.block_until_ready(y)

    # Block 0: 16x16 conv-relu x2 -> (2, 8, 16, 16)
    # Block 1: avgpool -> 8x8, conv-relu x2 -> (2, 16, 8, 8)
    assert y.shape == (2, num_filters[-1], 8, 8), y.shape
    assert bool(jnp.all(y >= 0.0))          # final ReLU
    assert bool(jnp.all(jnp.isfinite(y)))
    print("KERNEL_OK")
</pallas_src>

<mosaic_0001>
module attributes {stable_mosaic.version = 11 : i64} {
  func.func @kernel(%arg0: i32, %arg1: memref<32x128xf32, #tpu.memory_space<vmem>>, %arg2: memref<3x128x128xbf16, #tpu.memory_space<vmem>>, %arg3: memref<1x128xf32, #tpu.memory_space<vmem>>, %arg4: memref<32x32xbf16, #tpu.memory_space<vmem>>, %arg5: memref<32x32xbf16, #tpu.memory_space<vmem>>, %arg6: memref<3x128x128xbf16, #tpu.memory_space<vmem>>, %arg7: memref<1x128xf32, #tpu.memory_space<vmem>>, %arg8: memref<32x32xbf16, #tpu.memory_space<vmem>>, %arg9: memref<32x32xbf16, #tpu.memory_space<vmem>>, %arg10: memref<16x32xbf16, #tpu.memory_space<vmem>>, %arg11: memref<128x64xbf16, #tpu.memory_space<vmem>>, %arg12: memref<3x64x128xbf16, #tpu.memory_space<vmem>>, %arg13: memref<1x128xf32, #tpu.memory_space<vmem>>, %arg14: memref<16x16xbf16, #tpu.memory_space<vmem>>, %arg15: memref<16x16xbf16, #tpu.memory_space<vmem>>, %arg16: memref<3x128x128xbf16, #tpu.memory_space<vmem>>, %arg17: memref<1x128xf32, #tpu.memory_space<vmem>>, %arg18: memref<16x16xbf16, #tpu.memory_space<vmem>>, %arg19: memref<16x16xbf16, #tpu.memory_space<vmem>>, %arg20: memref<16x128xf32, #tpu.memory_space<vmem>>) attributes {dimension_semantics = [#tpu.dimension_semantics<parallel>], iteration_bounds = array<i64: 1>, scalar_prefetch = 0 : i64, scratch_operands = 0 : i64, tpu.core_type = #tpu.core_type<tc>, window_params = [{transform_indices = @transform_0, window_bounds = array<i64: 32, 128>}, {pipeline_mode = #tpu.pipeline_mode<synchronous>, transform_indices = @transform_1, window_bounds = array<i64: 3, 128, 128>}, {pipeline_mode = #tpu.pipeline_mode<synchronous>, transform_indices = @transform_2, window_bounds = array<i64: 1, 128>}, {pipeline_mode = #tpu.pipeline_mode<synchronous>, transform_indices = @transform_3, window_bounds = array<i64: 32, 32>}, {pipeline_mode = #tpu.pipeline_mode<synchronous>, transform_indices = @transform_4, window_bounds = array<i64: 32, 32>}, {pipeline_mode = #tpu.pipeline_mode<synchronous>, transform_indices = @transform_5, window_bounds = array<i64: 3, 128, 128>}, {pipeline_mode = #tpu.pipeline_mode<synchronous>, transform_indices = @transform_6, window_bounds = array<i64: 1, 128>}, {pipeline_mode = #tpu.pipeline_mode<synchronous>, transform_indices = @transform_7, window_bounds = array<i64: 32, 32>}, {pipeline_mode = #tpu.pipeline_mode<synchronous>, transform_indices = @transform_8, window_bounds = array<i64: 32, 32>}, {pipeline_mode = #tpu.pipeline_mode<synchronous>, transform_indices = @transform_9, window_bounds = array<i64: 16, 32>}, {pipeline_mode = #tpu.pipeline_mode<synchronous>, transform_indices = @transform_10, window_bounds = array<i64: 128, 64>}, {pipeline_mode = #tpu.pipeline_mode<synchronous>, transform_indices = @transform_11, window_bounds = array<i64: 3, 64, 128>}, {pipeline_mode = #tpu.pipeline_mode<synchronous>, transform_indices = @transform_12, window_bounds = array<i64: 1, 128>}, {pipeline_mode = #tpu.pipeline_mode<synchronous>, transform_indices = @transform_13, window_bounds = array<i64: 16, 16>}, {pipeline_mode = #tpu.pipeline_mode<synchronous>, transform_indices = @transform_14, window_bounds = array<i64: 16, 16>}, {pipeline_mode = #tpu.pipeline_mode<synchronous>, transform_indices = @transform_15, window_bounds = array<i64: 3, 128, 128>}, {pipeline_mode = #tpu.pipeline_mode<synchronous>, transform_indices = @transform_16, window_bounds = array<i64: 1, 128>}, {pipeline_mode = #tpu.pipeline_mode<synchronous>, transform_indices = @transform_17, window_bounds = array<i64: 16, 16>}, {pipeline_mode = #tpu.pipeline_mode<synchronous>, transform_indices = @transform_18, window_bounds = array<i64: 16, 16>}, {transform_indices = @transform_19, window_bounds = array<i64: 16, 128>}]} {
    %c0 = arith.constant 0 : index
    %c0_0 = arith.constant 0 : index
    %0 = vector.load %arg1[%c0, %c0_0] : memref<32x128xf32, #tpu.memory_space<vmem>>, vector<32x128xf32>
    %1 = arith.truncf %0 : vector<32x128xf32> to vector<32x128xbf16>
    %c0_1 = arith.constant 0 : index
    %c0_2 = arith.constant 0 : index
    %2 = vector.load %arg4[%c0_1, %c0_2] : memref<32x32xbf16, #tpu.memory_space<vmem>>, vector<32x32xbf16>
    %cst = arith.constant dense<0.000000e+00> : vector<32x128xf32>
    %3 = tpu.matmul %2, %1, %cst {dimension_numbers = #tpu.dot_dimension_numbers<[1], [0], [0], [1], [0, 0, 1, 1], [], []>} : vector<32x32xbf16>, vector<32x128xbf16>, vector<32x128xf32> -> vector<32x128xf32>
    %4 = arith.truncf %3 : vector<32x128xf32> to vector<32x128xbf16>
    %c0_3 = arith.constant 0 : index
    %c0_4 = arith.constant 0 : index
    %5 = vector.load %arg5[%c0_3, %c0_4] : memref<32x32xbf16, #tpu.memory_space<vmem>>, vector<32x32xbf16>
    %cst_5 = arith.constant dense<0.000000e+00> : vector<32x128xf32>
    %6 = tpu.matmul %5, %1, %cst_5 {dimension_numbers = #tpu.dot_dimension_numbers<[1], [0], [0], [1], [0, 0, 1, 1], [], []>} : vector<32x32xbf16>, vector<32x128xbf16>, vector<32x128xf32> -> vector<32x128xf32>
    %7 = arith.truncf %6 : vector<32x128xf32> to vector<32x128xbf16>
    %c0_6 = arith.constant 0 : index
    %c0_7 = arith.constant 0 : index
    %c0_8 = arith.constant 0 : index
    %8 = vector.load %arg2[%c0_6, %c0_7, %c0_8] : memref<3x128x128xbf16, #tpu.memory_space<vmem>>, vector<1x128x128xbf16>
    %9 = vector.shape_cast %8 : vector<1x128x128xbf16> to vector<128x128xbf16>
    %cst_9 = arith.constant dense<0.000000e+00> : vector<32x128xf32>
    %10 = tpu.matmul %4, %9, %cst_9 {dimension_numbers = #tpu.dot_dimension_numbers<[1], [0], [0], [1], [0, 0, 1, 1], [], []>} : vector<32x128xbf16>, vector<128x128xbf16>, vector<32x128xf32> -> vector<32x128xf32>
    %c1 = arith.constant 1 : index
    %c0_10 = arith.constant 0 : index
    %c0_11 = arith.constant 0 : index
    %11 = vector.load %arg2[%c1, %c0_10, %c0_11] : memref<3x128x128xbf16, #tpu.memory_space<vmem>>, vector<1x128x128xbf16>
    %12 = vector.shape_cast %11 : vector<1x128x128xbf16> to vector<128x128xbf16>
    %cst_12 = arith.constant dense<0.000000e+00> : vector<32x128xf32>
    %13 = tpu.matmul %1, %12, %cst_12 {dimension_numbers = #tpu.dot_dimension_numbers<[1], [0], [0], [1], [0, 0, 1, 1], [], []>} : vector<32x128xbf16>, vector<128x128xbf16>, vector<32x128xf32> -> vector<32x128xf32>
    %14 = arith.addf %10, %13 : vector<32x128xf32>
    %c2 = arith.constant 2 : index
    %c0_13 = arith.constant 0 : index
    %c0_14 = arith.constant 0 : index
    %15 = vector.load %arg2[%c2, %c0_13, %c0_14] : memref<3x128x128xbf16, #tpu.memory_space<vmem>>, vector<1x128x128xbf16>
    %16 = vector.shape_cast %15 : vector<1x128x128xbf16> to vector<128x128xbf16>
    %cst_15 = arith.constant dense<0.000000e+00> : vector<32x128xf32>
    %17 = tpu.matmul %7, %16, %cst_15 {dimension_numbers = #tpu.dot_dimension_numbers<[1], [0], [0], [1], [0, 0, 1, 1], [], []>} : vector<32x128xbf16>, vector<128x128xbf16>, vector<32x128xf32> -> vector<32x128xf32>
    %18 = arith.addf %14, %17 : vector<32x128xf32>
    %c0_16 = arith.constant 0 : index
    %c0_17 = arith.constant 0 : index
    %19 = vector.load %arg3[%c0_16, %c0_17] : memref<1x128xf32, #tpu.memory_space<vmem>>, vector<1x128xf32>
    %20 = vector.broadcast %19 : vector<1x128xf32> to vector<32x128xf32>
    %21 = arith.addf %18, %20 : vector<32x128xf32>
    %cst_18 = arith.constant 0.000000e+00 : f32
    %22 = vector.broadcast %cst_18 : f32 to vector<32x128xf32>
    %23 = arith.maximumf %21, %22 : vector<32x128xf32>
    %24 = arith.truncf %23 : vector<32x128xf32> to vector<32x128xbf16>
    %c0_19 = arith.constant 0 : index
    %c0_20 = arith.constant 0 : index
    %25 = vector.load %arg8[%c0_19, %c0_20] : memref<32x32xbf16, #tpu.memory_space<vmem>>, vector<32x32xbf16>
    %cst_21 = arith.constant dense<0.000000e+00> : vector<32x128xf32>
    %26 = tpu.matmul %25, %24, %cst_21 {dimension_numbers = #tpu.dot_dimension_numbers<[1], [0], [0], [1], [0, 0, 1, 1], [], []>} : vector<32x32xbf16>, vector<32x128xbf16>, vector<32x128xf32> -> vector<32x128xf32>
    %27 = arith.truncf %26 : vector<32x128xf32> to vector<32x128xbf16>
    %c0_22 = arith.constant 0 : index
    %c0_23 = arith.constant 0 : index
    %28 = vector.load %arg9[%c0_22, %c0_23] : memref<32x32xbf16, #tpu.memory_space<vmem>>, vector<32x32xbf16>
    %cst_24 = arith.constant dense<0.000000e+00> : vector<32x128xf32>
    %29 = tpu.matmul %28, %24, %cst_24 {dimension_numbers = #tpu.dot_dimension_numbers<[1], [0], [0], [1], [0, 0, 1, 1], [], []>} : vector<32x32xbf16>, vector<32x128xbf16>, vector<32x128xf32> -> vector<32x128xf32>
    %30 = arith.truncf %29 : vector<32x128xf32> to vector<32x128xbf16>
    %c0_25 = arith.constant 0 : index
    %c0_26 = arith.constant 0 : index
    %c0_27 = arith.constant 0 : index
    %31 = vector.load %arg6[%c0_25, %c0_26, %c0_27] : memref<3x128x128xbf16, #tpu.memory_space<vmem>>, vector<1x128x128xbf16>
    %32 = vector.shape_cast %31 : vector<1x128x128xbf16> to vector<128x128xbf16>
    %cst_28 = arith.constant dense<0.000000e+00> : vector<32x128xf32>
    %33 = tpu.matmul %27, %32, %cst_28 {dimension_numbers = #tpu.dot_dimension_numbers<[1], [0], [0], [1], [0, 0, 1, 1], [], []>} : vector<32x128xbf16>, vector<128x128xbf16>, vector<32x128xf32> -> vector<32x128xf32>
    %c1_29 = arith.constant 1 : index
    %c0_30 = arith.constant 0 : index
    %c0_31 = arith.constant 0 : index
    %34 = vector.load %arg6[%c1_29, %c0_30, %c0_31] : memref<3x128x128xbf16, #tpu.memory_space<vmem>>, vector<1x128x128xbf16>
    %35 = vector.shape_cast %34 : vector<1x128x128xbf16> to vector<128x128xbf16>
    %cst_32 = arith.constant dense<0.000000e+00> : vector<32x128xf32>
    %36 = tpu.matmul %24, %35, %cst_32 {dimension_numbers = #tpu.dot_dimension_numbers<[1], [0], [0], [1], [0, 0, 1, 1], [], []>} : vector<32x128xbf16>, vector<128x128xbf16>, vector<32x128xf32> -> vector<32x128xf32>
    %37 = arith.addf %33, %36 : vector<32x128xf32>
    %c2_33 = arith.constant 2 : index
    %c0_34 = arith.constant 0 : index
    %c0_35 = arith.constant 0 : index
    %38 = vector.load %arg6[%c2_33, %c0_34, %c0_35] : memref<3x128x128xbf16, #tpu.memory_space<vmem>>, vector<1x128x128xbf16>
    %39 = vector.shape_cast %38 : vector<1x128x128xbf16> to vector<128x128xbf16>
    %cst_36 = arith.constant dense<0.000000e+00> : vector<32x128xf32>
    %40 = tpu.matmul %30, %39, %cst_36 {dimension_numbers = #tpu.dot_dimension_numbers<[1], [0], [0], [1], [0, 0, 1, 1], [], []>} : vector<32x128xbf16>, vector<128x128xbf16>, vector<32x128xf32> -> vector<32x128xf32>
    %41 = arith.addf %37, %40 : vector<32x128xf32>
    %c0_37 = arith.constant 0 : index
    %c0_38 = arith.constant 0 : index
    %42 = vector.load %arg7[%c0_37, %c0_38] : memref<1x128xf32, #tpu.memory_space<vmem>>, vector<1x128xf32>
    %43 = vector.broadcast %42 : vector<1x128xf32> to vector<32x128xf32>
    %44 = arith.addf %41, %43 : vector<32x128xf32>
    %cst_39 = arith.constant 0.000000e+00 : f32
    %45 = vector.broadcast %cst_39 : f32 to vector<32x128xf32>
    %46 = arith.maximumf %44, %45 : vector<32x128xf32>
    %47 = arith.truncf %46 : vector<32x128xf32> to vector<32x128xbf16>
    %c0_40 = arith.constant 0 : index
    %c0_41 = arith.constant 0 : index
    %48 = vector.load %arg10[%c0_40, %c0_41] : memref<16x32xbf16, #tpu.memory_space<vmem>>, vector<16x32xbf16>
    %cst_42 = arith.constant dense<0.000000e+00> : vector<16x128xf32>
    %49 = tpu.matmul %48, %47, %cst_42 {dimension_numbers = #tpu.dot_dimension_numbers<[1], [0], [0], [1], [0, 0, 1, 1], [], []>} : vector<16x32xbf16>, vector<32x128xbf16>, vector<16x128xf32> -> vector<16x128xf32>
    %50 = arith.truncf %49 : vector<16x128xf32> to vector<16x128xbf16>
    %c0_43 = arith.constant 0 : index
    %c0_44 = arith.constant 0 : index
    %51 = vector.load %arg11[%c0_43, %c0_44] : memref<128x64xbf16, #tpu.memory_space<vmem>>, vector<128x64xbf16>
    %cst_45 = arith.constant dense<0.000000e+00> : vector<16x64xf32>
    %52 = tpu.matmul %50, %51, %cst_45 {dimension_numbers = #tpu.dot_dimension_numbers<[1], [0], [0], [1], [0, 0, 1, 1], [], []>} : vector<16x128xbf16>, vector<128x64xbf16>, vector<16x64xf32> -> vector<16x64xf32>
    %53 = arith.truncf %52 : vector<16x64xf32> to vector<16x64xbf16>
    %c0_46 = arith.constant 0 : index
    %c0_47 = arith.constant 0 : index
    %54 = vector.load %arg14[%c0_46, %c0_47] : memref<16x16xbf16, #tpu.memory_space<vmem>>, vector<16x16xbf16>
    %cst_48 = arith.constant dense<0.000000e+00> : vector<16x64xf32>
    %55 = tpu.matmul %54, %53, %cst_48 {dimension_numbers = #tpu.dot_dimension_numbers<[1], [0], [0], [1], [0, 0, 1, 1], [], []>} : vector<16x16xbf16>, vector<16x64xbf16>, vector<16x64xf32> -> vector<16x64xf32>
    %56 = arith.truncf %55 : vector<16x64xf32> to vector<16x64xbf16>
    %c0_49 = arith.constant 0 : index
    %c0_50 = arith.constant 0 : index
    %57 = vector.load %arg15[%c0_49, %c0_50] : memref<16x16xbf16, #tpu.memory_space<vmem>>, vector<16x16xbf16>
    %cst_51 = arith.constant dense<0.000000e+00> : vector<16x64xf32>
    %58 = tpu.matmul %57, %53, %cst_51 {dimension_numbers = #tpu.dot_dimension_numbers<[1], [0], [0], [1], [0, 0, 1, 1], [], []>} : vector<16x16xbf16>, vector<16x64xbf16>, vector<16x64xf32> -> vector<16x64xf32>
    %59 = arith.truncf %58 : vector<16x64xf32> to vector<16x64xbf16>
    %c0_52 = arith.constant 0 : index
    %c0_53 = arith.constant 0 : index
    %c0_54 = arith.constant 0 : index
    %60 = vector.load %arg12[%c0_52, %c0_53, %c0_54] : memref<3x64x128xbf16, #tpu.memory_space<vmem>>, vector<1x64x128xbf16>
    %61 = vector.shape_cast %60 : vector<1x64x128xbf16> to vector<64x128xbf16>
    %cst_55 = arith.constant dense<0.000000e+00> : vector<16x128xf32>
    %62 = tpu.matmul %56, %61, %cst_55 {dimension_numbers = #tpu.dot_dimension_numbers<[1], [0], [0], [1], [0, 0, 1, 1], [], []>} : vector<16x64xbf16>, vector<64x128xbf16>, vector<16x128xf32> -> vector<16x128xf32>
    %c1_56 = arith.constant 1 : index
    %c0_57 = arith.constant 0 : index
    %c0_58 = arith.constant 0 : index
    %63 = vector.load %arg12[%c1_56, %c0_57, %c0_58] : memref<3x64x128xbf16, #tpu.memory_space<vmem>>, vector<1x64x128xbf16>
    %64 = vector.shape_cast %63 : vector<1x64x128xbf16> to vector<64x128xbf16>
    %cst_59 = arith.constant dense<0.000000e+00> : vector<16x128xf32>
    %65 = tpu.matmul %53, %64, %cst_59 {dimension_numbers = #tpu.dot_dimension_numbers<[1], [0], [0], [1], [0, 0, 1, 1], [], []>} : vector<16x64xbf16>, vector<64x128xbf16>, vector<16x128xf32> -> vector<16x128xf32>
    %66 = arith.addf %62, %65 : vector<16x128xf32>
    %c2_60 = arith.constant 2 : index
    %c0_61 = arith.constant 0 : index
    %c0_62 = arith.constant 0 : index
    %67 = vector.load %arg12[%c2_60, %c0_61, %c0_62] : memref<3x64x128xbf16, #tpu.memory_space<vmem>>, vector<1x64x128xbf16>
    %68 = vector.shape_cast %67 : vector<1x64x128xbf16> to vector<64x128xbf16>
    %cst_63 = arith.constant dense<0.000000e+00> : vector<16x128xf32>
    %69 = tpu.matmul %59, %68, %cst_63 {dimension_numbers = #tpu.dot_dimension_numbers<[1], [0], [0], [1], [0, 0, 1, 1], [], []>} : vector<16x64xbf16>, vector<64x128xbf16>, vector<16x128xf32> -> vector<16x128xf32>
    %70 = arith.addf %66, %69 : vector<16x128xf32>
    %c0_64 = arith.constant 0 : index
    %c0_65 = arith.constant 0 : index
    %71 = vector.load %arg13[%c0_64, %c0_65] : memref<1x128xf32, #tpu.memory_space<vmem>>, vector<1x128xf32>
    %72 = vector.broadcast %71 : vector<1x128xf32> to vector<16x128xf32>
    %73 = arith.addf %70, %72 : vector<16x128xf32>
    %cst_66 = arith.constant 0.000000e+00 : f32
    %74 = vector.broadcast %cst_66 : f32 to vector<16x128xf32>
    %75 = arith.maximumf %73, %74 : vector<16x128xf32>
    %76 = arith.truncf %75 : vector<16x128xf32> to vector<16x128xbf16>
    %c0_67 = arith.constant 0 : index
    %c0_68 = arith.constant 0 : index
    %77 = vector.load %arg18[%c0_67, %c0_68] : memref<16x16xbf16, #tpu.memory_space<vmem>>, vector<16x16xbf16>
    %cst_69 = arith.constant dense<0.000000e+00> : vector<16x128xf32>
    %78 = tpu.matmul %77, %76, %cst_69 {dimension_numbers = #tpu.dot_dimension_numbers<[1], [0], [0], [1], [0, 0, 1, 1], [], []>} : vector<16x16xbf16>, vector<16x128xbf16>, vector<16x128xf32> -> vector<16x128xf32>
    %79 = arith.truncf %78 : vector<16x128xf32> to vector<16x128xbf16>
    %c0_70 = arith.constant 0 : index
    %c0_71 = arith.constant 0 : index
    %80 = vector.load %arg19[%c0_70, %c0_71] : memref<16x16xbf16, #tpu.memory_space<vmem>>, vector<16x16xbf16>
    %cst_72 = arith.constant dense<0.000000e+00> : vector<16x128xf32>
    %81 = tpu.matmul %80, %76, %cst_72 {dimension_numbers = #tpu.dot_dimension_numbers<[1], [0], [0], [1], [0, 0, 1, 1], [], []>} : vector<16x16xbf16>, vector<16x128xbf16>, vector<16x128xf32> -> vector<16x128xf32>
    %82 = arith.truncf %81 : vector<16x128xf32> to vector<16x128xbf16>
    %c0_73 = arith.constant 0 : index
    %c0_74 = arith.constant 0 : index
    %c0_75 = arith.constant 0 : index
    %83 = vector.load %arg16[%c0_73, %c0_74, %c0_75] : memref<3x128x128xbf16, #tpu.memory_space<vmem>>, vector<1x128x128xbf16>
    %84 = vector.shape_cast %83 : vector<1x128x128xbf16> to vector<128x128xbf16>
    %cst_76 = arith.constant dense<0.000000e+00> : vector<16x128xf32>
    %85 = tpu.matmul %79, %84, %cst_76 {dimension_numbers = #tpu.dot_dimension_numbers<[1], [0], [0], [1], [0, 0, 1, 1], [], []>} : vector<16x128xbf16>, vector<128x128xbf16>, vector<16x128xf32> -> vector<16x128xf32>
    %c1_77 = arith.constant 1 : index
    %c0_78 = arith.constant 0 : index
    %c0_79 = arith.constant 0 : index
    %86 = vector.load %arg16[%c1_77, %c0_78, %c0_79] : memref<3x128x128xbf16, #tpu.memory_space<vmem>>, vector<1x128x128xbf16>
    %87 = vector.shape_cast %86 : vector<1x128x128xbf16> to vector<128x128xbf16>
    %cst_80 = arith.constant dense<0.000000e+00> : vector<16x128xf32>
    %88 = tpu.matmul %76, %87, %cst_80 {dimension_numbers = #tpu.dot_dimension_numbers<[1], [0], [0], [1], [0, 0, 1, 1], [], []>} : vector<16x128xbf16>, vector<128x128xbf16>, vector<16x128xf32> -> vector<16x128xf32>
    %89 = arith.addf %85, %88 : vector<16x128xf32>
    %c2_81 = arith.constant 2 : index
    %c0_82 = arith.constant 0 : index
    %c0_83 = arith.constant 0 : index
    %90 = vector.load %arg16[%c2_81, %c0_82, %c0_83] : memref<3x128x128xbf16, #tpu.memory_space<vmem>>, vector<1x128x128xbf16>
    %91 = vector.shape_cast %90 : vector<1x128x128xbf16> to vector<128x128xbf16>
    %cst_84 = arith.constant dense<0.000000e+00> : vector<16x128xf32>
    %92 = tpu.matmul %82, %91, %cst_84 {dimension_numbers = #tpu.dot_dimension_numbers<[1], [0], [0], [1], [0, 0, 1, 1], [], []>} : vector<16x128xbf16>, vector<128x128xbf16>, vector<16x128xf32> -> vector<16x128xf32>
    %93 = arith.addf %89, %92 : vector<16x128xf32>
    %c0_85 = arith.constant 0 : index
    %c0_86 = arith.constant 0 : index
    %94 = vector.load %arg17[%c0_85, %c0_86] : memref<1x128xf32, #tpu.memory_space<vmem>>, vector<1x128xf32>
    %95 = vector.broadcast %94 : vector<1x128xf32> to vector<16x128xf32>
    %96 = arith.addf %93, %95 : vector<16x128xf32>
    %cst_87 = arith.constant 0.000000e+00 : f32
    %97 = vector.broadcast %cst_87 : f32 to vector<16x128xf32>
    %98 = arith.maximumf %96, %97 : vector<16x128xf32>
    %c0_88 = arith.constant 0 : index
    %c0_89 = arith.constant 0 : index
    %99 = vector.load %arg20[%c0_88, %c0_89] : memref<16x128xf32, #tpu.memory_space<vmem>>, vector<16x128xf32>
    tpu.vector_store %arg20[%c0_88, %c0_89], %98 {strides = array<i32>} : memref<16x128xf32, #tpu.memory_space<vmem>>, vector<16x128xf32>,
    return
  }
  func.func @transform_0(%arg0: i32) -> (i32, i32) {
    %c0_i32 = arith.constant 0 : i32
    %c0_i32_0 = arith.constant 0 : i32
    return %arg0, %c0_i32 : i32, i32
  }
  func.func @transform_1(%arg0: i32) -> (i32, i32, i32) {
    %c0_i32 = arith.constant 0 : i32
    %c0_i32_0 = arith.constant 0 : i32
    %c0_i32_1 = arith.constant 0 : i32
    %c0_i32_2 = arith.constant 0 : i32
    return %c0_i32, %c0_i32_0, %c0_i32_1 : i32, i32, i32
  }
  func.func @transform_2(%arg0: i32) -> (i32, i32) {
    %c0_i32 = arith.constant 0 : i32
    %c0_i32_0 = arith.constant 0 : i32
    %c0_i32_1 = arith.constant 0 : i32
    return %c0_i32, %c0_i32_0 : i32, i32
  }
  func.func @transform_3(%arg0: i32) -> (i32, i32) {
    %c0_i32 = arith.constant 0 : i32
    %c0_i32_0 = arith.constant 0 : i32
    %c0_i32_1 = arith.constant 0 : i32
    return %c0_i32, %c0_i32_0 : i32, i32
  }
  func.func @transform_4(%arg0: i32) -> (i32, i32) {
    %c0_i32 = arith.constant 0 : i32
    %c0_i32_0 = arith.constant 0 : i32
    %c0_i32_1 = arith.constant 0 : i32
    return %c0_i32, %c0_i32_0 : i32, i32
  }
  func.func @transform_5(%arg0: i32) -> (i32, i32, i32) {
    %c0_i32 = arith.constant 0 : i32
    %c0_i32_0 = arith.constant 0 : i32
    %c0_i32_1 = arith.constant 0 : i32
    %c0_i32_2 = arith.constant 0 : i32
    return %c0_i32, %c0_i32_0, %c0_i32_1 : i32, i32, i32
  }
  func.func @transform_6(%arg0: i32) -> (i32, i32) {
    %c0_i32 = arith.constant 0 : i32
    %c0_i32_0 = arith.constant 0 : i32
    %c0_i32_1 = arith.constant 0 : i32
    return %c0_i32, %c0_i32_0 : i32, i32
  }
  func.func @transform_7(%arg0: i32) -> (i32, i32) {
    %c0_i32 = arith.constant 0 : i32
    %c0_i32_0 = arith.constant 0 : i32
    %c0_i32_1 = arith.constant 0 : i32
    return %c0_i32, %c0_i32_0 : i32, i32
  }
  func.func @transform_8(%arg0: i32) -> (i32, i32) {
    %c0_i32 = arith.constant 0 : i32
    %c0_i32_0 = arith.constant 0 : i32
    %c0_i32_1 = arith.constant 0 : i32
    return %c0_i32, %c0_i32_0 : i32, i32
  }
  func.func @transform_9(%arg0: i32) -> (i32, i32) {
    %c0_i32 = arith.constant 0 : i32
    %c0_i32_0 = arith.constant 0 : i32
    %c0_i32_1 = arith.constant 0 : i32
    return %c0_i32, %c0_i32_0 : i32, i32
  }
  func.func @transform_10(%arg0: i32) -> (i32, i32) {
    %c0_i32 = arith.constant 0 : i32
    %c0_i32_0 = arith.constant 0 : i32
    %c0_i32_1 = arith.constant 0 : i32
    return %c0_i32, %c0_i32_0 : i32, i32
  }
  func.func @transform_11(%arg0: i32) -> (i32, i32, i32) {
    %c0_i32 = arith.constant 0 : i32
    %c0_i32_0 = arith.constant 0 : i32
    %c0_i32_1 = arith.constant 0 : i32
    %c0_i32_2 = arith.constant 0 : i32
    return %c0_i32, %c0_i32_0, %c0_i32_1 : i32, i32, i32
  }
  func.func @transform_12(%arg0: i32) -> (i32, i32) {
    %c0_i32 = arith.constant 0 : i32
    %c0_i32_0 = arith.constant 0 : i32
    %c0_i32_1 = arith.constant 0 : i32
    return %c0_i32, %c0_i32_0 : i32, i32
  }
  func.func @transform_13(%arg0: i32) -> (i32, i32) {
    %c0_i32 = arith.constant 0 : i32
    %c0_i32_0 = arith.constant 0 : i32
    %c0_i32_1 = arith.constant 0 : i32
    return %c0_i32, %c0_i32_0 : i32, i32
  }
  func.func @transform_14(%arg0: i32) -> (i32, i32) {
    %c0_i32 = arith.constant 0 : i32
    %c0_i32_0 = arith.constant 0 : i32
    %c0_i32_1 = arith.constant 0 : i32
    return %c0_i32, %c0_i32_0 : i32, i32
  }
  func.func @transform_15(%arg0: i32) -> (i32, i32, i32) {
    %c0_i32 = arith.constant 0 : i32
    %c0_i32_0 = arith.constant 0 : i32
    %c0_i32_1 = arith.constant 0 : i32
    %c0_i32_2 = arith.constant 0 : i32
    return %c0_i32, %c0_i32_0, %c0_i32_1 : i32, i32, i32
  }
  func.func @transform_16(%arg0: i32) -> (i32, i32) {
    %c0_i32 = arith.constant 0 : i32
    %c0_i32_0 = arith.constant 0 : i32
    %c0_i32_1 = arith.constant 0 : i32
    return %c0_i32, %c0_i32_0 : i32, i32
  }
  func.func @transform_17(%arg0: i32) -> (i32, i32) {
    %c0_i32 = arith.constant 0 : i32
    %c0_i32_0 = arith.constant 0 : i32
    %c0_i32_1 = arith.constant 0 : i32
    return %c0_i32, %c0_i32_0 : i32, i32
  }
  func.func @transform_18(%arg0: i32) -> (i32, i32) {
    %c0_i32 = arith.constant 0 : i32
    %c0_i32_0 = arith.constant 0 : i32
    %c0_i32_1 = arith.constant 0 : i32
    return %c0_i32, %c0_i32_0 : i32, i32
  }
  func.func @transform_19(%arg0: i32) -> (i32, i32) {
    %c0_i32 = arith.constant 0 : i32
    %c0_i32_0 = arith.constant 0 : i32
    return %arg0, %c0_i32 : i32, i32
  }
}

</mosaic_0001>

<llo_original>
// kernel: tpu_custom_call.1
$region0: #{tpu_custom_call.1}
  #allocation0 [shape = 'u32[]', space=smem, size = 0x4, offset = 0x4, fixed_abs, tag = 'smem constant byte address 0x4 - core index']
  #allocation1 [shape = 'u32[72,128]{1,0:T(1,128)}', space=vmem, size = 0x9000, scoped, tag = 'internal scratch']
  %s0 = inlined_call_operand.hbm [shape: f32[32,128], index: 0, kind: input, shape index: {}]
  %s1 = inlined_call_operand.hbm [shape: bf16[3,128,128], index: 1, kind: input, shape index: {}]
  %s2 = inlined_call_operand.vmem [shape: f32[1,128], index: 2, kind: input, shape index: {}]
  %s3 = inlined_call_operand.hbm [shape: bf16[32,32], index: 3, kind: input, shape index: {}]
  %s4 = inlined_call_operand.hbm [shape: bf16[32,32], index: 4, kind: input, shape index: {}]
  %s5 = inlined_call_operand.hbm [shape: bf16[3,128,128], index: 5, kind: input, shape index: {}]
  %s6 = inlined_call_operand.hbm [shape: f32[1,128], index: 6, kind: input, shape index: {}]
  %s7 = inlined_call_operand.hbm [shape: bf16[32,32], index: 7, kind: input, shape index: {}]
  %s8 = inlined_call_operand.hbm [shape: bf16[32,32], index: 8, kind: input, shape index: {}]
  %s9 = inlined_call_operand.vmem [shape: bf16[16,32], index: 9, kind: input, shape index: {}]
  %s10 = inlined_call_operand.vmem [shape: bf16[128,64], index: 10, kind: input, shape index: {}]
  %s11 = inlined_call_operand.vmem [shape: bf16[3,64,128], index: 11, kind: input, shape index: {}]
  %s12 = inlined_call_operand.hbm [shape: f32[1,128], index: 12, kind: input, shape index: {}]
  %s13 = inlined_call_operand.hbm [shape: bf16[16,16], index: 13, kind: input, shape index: {}]
  %s14 = inlined_call_operand.hbm [shape: bf16[16,16], index: 14, kind: input, shape index: {}]
  %s15 = inlined_call_operand.hbm [shape: bf16[3,128,128], index: 15, kind: input, shape index: {}]
  %s16 = inlined_call_operand.hbm [shape: f32[1,128], index: 16, kind: input, shape index: {}]
  %s17 = inlined_call_operand.hbm [shape: bf16[16,16], index: 17, kind: input, shape index: {}]
  %s18 = inlined_call_operand.vmem [shape: bf16[16,16], index: 18, kind: input, shape index: {}]
  %s19 = inlined_call_operand.hbm [shape: f32[16,128], index: 19, kind: output, shape index: {}]
  %s20 = sld [smem:[#allocation0]]
  $region142: #{tpu_custom_call.1} parent=0
    _
  %s22 = ssub.s32 1, %s20
  %s23 = scalar_select 0, %s22, %s20
  $region1: #{tpu_custom_call.1} parent=0
    #allocation2 [shape = 'u8[16384]{0}', space=vmem, size = 0x4000, scoped, tag = 'input window, operand 0, single buffered']
    #allocation3 [shape = 's32[1]{0}', space=sflag, size = 0x4, scoped, tag = 'scoped memory for tpu_custom_call.1']
    #allocation4 [shape = 's32[1]{0}', space=sflag, size = 0x4, scoped, tag = 'scoped memory for tpu_custom_call.1']
    #allocation5 [shape = 'u8[98304]{0}', space=vmem, size = 0x18000, scoped, tag = 'input window, operand 1, single buffered']
    #allocation6 [shape = 's32[1]{0}', space=sflag, size = 0x4, scoped, tag = 'scoped memory for tpu_custom_call.1']
    #allocation7 [shape = 'u8[8192]{0}', space=vmem, size = 0x2000, scoped, tag = 'input window, operand 3, single buffered']
    #allocation8 [shape = 'u8[8192]{0}', space=vmem, size = 0x2000, scoped, tag = 'input window, operand 4, single buffered']
    #allocation9 [shape = 's32[1]{0}', space=sflag, size = 0x4, scoped, tag = 'scoped memory for tpu_custom_call.1']
    #allocation10 [shape = 'u8[98304]{0}', space=vmem, size = 0x18000, scoped, tag = 'input window, operand 5, single buffered']
    #allocation11 [shape = 'u8[512]{0}', space=vmem, size = 0x400, scoped, tag = 'input window, operand 6, single buffered']
    #allocation12 [shape = 's32[1]{0}', space=sflag, size = 0x4, scoped, tag = 'scoped memory for tpu_custom_call.1']
    #allocation13 [shape = 'u8[8192]{0}', space=vmem, size = 0x2000, scoped, tag = 'input window, operand 7, single buffered']
    #allocation14 [shape = 'u8[8192]{0}', space=vmem, size = 0x2000, scoped, tag = 'input window, operand 8, single buffered']
    #allocation15 [shape = 's32[1]{0}', space=sflag, size = 0x4, scoped, tag = 'scoped memory for tpu_custom_call.1']
    #allocation16 [shape = 'u8[512]{0}', space=vmem, size = 0x400, scoped, tag = 'input window, operand 12, single buffered']
    #allocation17 [shape = 'u8[4096]{0}', space=vmem, size = 0x1000, scoped, tag = 'input window, operand 13, single buffered']
    #allocation18 [shape = 's32[1]{0}', space=sflag, size = 0x4, scoped, tag = 'scoped memory for tpu_custom_call.1']
    #allocation19 [shape = 'u8[4096]{0}', space=vmem, size = 0x1000, scoped, tag = 'input window, operand 14, single buffered']
    #allocation20 [shape = 'u8[98304]{0}', space=vmem, size = 0x18000, scoped, tag = 'input window, operand 15, single buffered']
    #allocation21 [shape = 's32[1]{0}', space=sflag, size = 0x4, scoped, tag = 'scoped memory for tpu_custom_call.1']
    #allocation22 [shape = 'u8[512]{0}', space=vmem, size = 0x400, scoped, tag = 'input window, operand 16, single buffered']
    #allocation23 [shape = 'u8[4096]{0}', space=vmem, size = 0x1000, scoped, tag = 'input window, operand 17, single buffered']
    #allocation24 [shape = 's32[1]{0}', space=sflag, size = 0x4, scoped, tag = 'scoped memory for tpu_custom_call.1']
    #allocation25 [shape = 'u8[8192]{0}', space=vmem, size = 0x2000, scoped, tag = 'output window, operand 0, single buffered']
    %24 = vsyncpa [#allocation3], 0
    %25 = vsyncpa [#allocation6], 0
    %26 = vsyncpa [#allocation9], 0
    %27 = vsyncpa [#allocation12], 0
    %28 = vsyncpa [#allocation15], 0
    %29 = vsyncpa [#allocation18], 0
    %30 = vsyncpa [#allocation21], 0
    %31 = vsyncpa [#allocation24], 0
    %32 = vsyncpa [#allocation4], 0
    // Predicated region
    $region2: #{tpu_custom_call.1} parent=1 // pred_check
      _
    $region3: #{tpu_custom_call.1} parent=1 // pred_check_branch
      %34 = sbr.rel (0) target = $region5
    $region4: #{tpu_custom_call.1} parent=1 // pred_region
      %36 = vsyncadd [#allocation3], 0
      %s37 = sshll.u32 %s0, 4
      %s38 = int_to_ptr.hbm [resolvable:$true] %s37
      %s39 = sshll.u32 [#allocation2], 4
      %s40 = int_to_ptr.vmem [resolvable:$true] %s39
      %45 = dma.hbm_to_vmem [thread:$0]  %s38, 512, %s40, [#allocation3], 128, 128, 8
    $region5: #{tpu_custom_call.1} parent=1 // pred_fallthru
      _
    // Predicated region
    $region6: #{tpu_custom_call.1} parent=1 // pred_check
      _
    $region7: #{tpu_custom_call.1} parent=1 // pred_check_branch
      %47 = sbr.rel (0) target = $region9
    $region8: #{tpu_custom_call.1} parent=1 // pred_region
      %49 = vsyncadd [#allocation6], 0
      %s50 = sshll.u32 %s1, 4
      %s51 = int_to_ptr.hbm [resolvable:$true] %s50
      %s52 = sshll.u32 [#allocation5], 4
      %s53 = int_to_ptr.vmem [resolvable:$true] %s52
      %58 = dma.hbm_to_vmem [thread:$0]  %s51, 3072, %s53, [#allocation6], 64, 64, 4
    $region9: #{tpu_custom_call.1} parent=1 // pred_fallthru
      _
    // Predicated region
    $region10: #{tpu_custom_call.1} parent=1 // pred_check
      _
    $region11: #{tpu_custom_call.1} parent=1 // pred_check_branch
      %60 = sbr.rel (0) target = $region13
    $region12: #{tpu_custom_call.1} parent=1 // pred_region
      _
    $region13: #{tpu_custom_call.1} parent=1 // pred_fallthru
      _
    // Predicated region
    $region14: #{tpu_custom_call.1} parent=1 // pred_check
      _
    $region15: #{tpu_custom_call.1} parent=1 // pred_check_branch
      %62 = sbr.rel (0) target = $region17
    $region16: #{tpu_custom_call.1} parent=1 // pred_region
      %64 = vsyncadd [#allocation6], 0
      %s65 = sshll.u32 %s3, 4
      %s66 = int_to_ptr.hbm [resolvable:$true] %s65
      %s67 = sshll.u32 [#allocation7], 4
      %s68 = int_to_ptr.vmem [resolvable:$true] %s67
      %73 = dma.hbm_to_vmem [thread:$0]  %s66, 256, %s68, [#allocation6], 64, 64, 4
    $region17: #{tpu_custom_call.1} parent=1 // pred_fallthru
      _
    // Predicated region
    $region18: #{tpu_custom_call.1} parent=1 // pred_check
      _
    $region19: #{tpu_custom_call.1} parent=1 // pred_check_branch
      %75 = sbr.rel (0) target = $region21
    $region20: #{tpu_custom_call.1} parent=1 // pred_region
      %77 = vsyncadd [#allocation9], 0
      %s78 = sshll.u32 %s4, 4
      %s79 = int_to_ptr.hbm [resolvable:$true] %s78
      %s80 = sshll.u32 [#allocation8], 4
      %s81 = int_to_ptr.vmem [resolvable:$true] %s80
      %86 = dma.hbm_to_vmem [thread:$0]  %s79, 256, %s81, [#allocation9], 64, 64, 4
    $region21: #{tpu_custom_call.1} parent=1 // pred_fallthru
      _
    // Predicated region
    $region22: #{tpu_custom_call.1} parent=1 // pred_check
      _
    $region23: #{tpu_custom_call.1} parent=1 // pred_check_branch
      %88 = sbr.rel (0) target = $region25
    $region24: #{tpu_custom_call.1} parent=1 // pred_region
      %90 = vsyncadd [#allocation9], 0
      %s91 = sshll.u32 %s5, 4
      %s92 = int_to_ptr.hbm [resolvable:$true] %s91
      %s93 = sshll.u32 [#allocation10], 4
      %s94 = int_to_ptr.vmem [resolvable:$true] %s93
      %99 = dma.hbm_to_vmem [thread:$0]  %s92, 3072, %s94, [#allocation9], 64, 64, 4
    $region25: #{tpu_custom_call.1} parent=1 // pred_fallthru
      _
    // Predicated region
    $region26: #{tpu_custom_call.1} parent=1 // pred_check
      _
    $region27: #{tpu_custom_call.1} parent=1 // pred_check_branch
      %101 = sbr.rel (0) target = $region29
    $region28: #{tpu_custom_call.1} parent=1 // pred_region
      %103 = vsyncadd [#allocation12], 0
      %s105 = sshll.u32 %s6, 4
      %s106 = int_to_ptr.hbm [resolvable:$true] %s105
      %s107 = sshll.u32 [#allocation11], 4
      %s108 = int_to_ptr.vmem [resolvable:$true] %s107
      %110 = dma.hbm_to_vmem [thread:$0]  %s106, 16, %s108, [#allocation12]
    $region29: #{tpu_custom_call.1} parent=1 // pred_fallthru
      _
    // Predicated region
    $region30: #{tpu_custom_call.1} parent=1 // pred_check
      _
    $region31: #{tpu_custom_call.1} parent=1 // pred_check_branch
      %112 = sbr.rel (0) target = $region33
    $region32: #{tpu_custom_call.1} parent=1 // pred_region
      %114 = vsyncadd [#allocation12], 0
      %s115 = sshll.u32 %s7, 4
      %s116 = int_to_ptr.hbm [resolvable:$true] %s115
      %s117 = sshll.u32 [#allocation13], 4
      %s118 = int_to_ptr.vmem [resolvable:$true] %s117
      %123 = dma.hbm_to_vmem [thread:$0]  %s116, 256, %s118, [#allocation12], 64, 64, 4
    $region33: #{tpu_custom_call.1} parent=1 // pred_fallthru
      _
    // Predicated region
    $region34: #{tpu_custom_call.1} parent=1 // pred_check
      _
    $region35: #{tpu_custom_call.1} parent=1 // pred_check_branch
      %125 = sbr.rel (0) target = $region37
    $region36: #{tpu_custom_call.1} parent=1 // pred_region
      %127 = vsyncadd [#allocation15], 0
      %s128 = sshll.u32 %s8, 4
      %s129 = int_to_ptr.hbm [resolvable:$true] %s128
      %s130 = sshll.u32 [#allocation14], 4
      %s131 = int_to_ptr.vmem [resolvable:$true] %s130
      %136 = dma.hbm_to_vmem [thread:$0]  %s129, 256, %s131, [#allocation15], 64, 64, 4
    $region37: #{tpu_custom_call.1} parent=1 // pred_fallthru
      _
    // Predicated region
    $region38: #{tpu_custom_call.1} parent=1 // pred_check
      _
    $region39: #{tpu_custom_call.1} parent=1 // pred_check_branch
      %138 = sbr.rel (0) target = $region41
    $region40: #{tpu_custom_call.1} parent=1 // pred_region
      _
    $region41: #{tpu_custom_call.1} parent=1 // pred_fallthru
      _
    // Predicated region
    $region42: #{tpu_custom_call.1} parent=1 // pred_check
      _
    $region43: #{tpu_custom_call.1} parent=1 // pred_check_branch
      %140 = sbr.rel (0) target = $region45
    $region44: #{tpu_custom_call.1} parent=1 // pred_region
      _
    $region45: #{tpu_custom_call.1} parent=1 // pred_fallthru
      _
    // Predicated region
    $region46: #{tpu_custom_call.1} parent=1 // pred_check
      _
    $region47: #{tpu_custom_call.1} parent=1 // pred_check_branch
      %142 = sbr.rel (0) target = $region49
    $region48: #{tpu_custom_call.1} parent=1 // pred_region
      _
    $region49: #{tpu_custom_call.1} parent=1 // pred_fallthru
      _
    // Predicated region
    $region50: #{tpu_custom_call.1} parent=1 // pred_check
      _
    $region51: #{tpu_custom_call.1} parent=1 // pred_check_branch
      %144 = sbr.rel (0) target = $region53
    $region52: #{tpu_custom_call.1} parent=1 // pred_region
      %146 = vsyncadd [#allocation15], 0
      %s148 = sshll.u32 %s12, 4
      %s149 = int_to_ptr.hbm [resolvable:$true] %s148
      %s150 = sshll.u32 [#allocation16], 4
      %s151 = int_to_ptr.vmem [resolvable:$true] %s150
      %153 = dma.hbm_to_vmem [thread:$0]  %s149, 16, %s151, [#allocation15]
    $region53: #{tpu_custom_call.1} parent=1 // pred_fallthru
      _
    // Predicated region
    $region54: #{tpu_custom_call.1} parent=1 // pred_check
      _
    $region55: #{tpu_custom_call.1} parent=1 // pred_check_branch
      %155 = sbr.rel (0) target = $region57
    $region56: #{tpu_custom_call.1} parent=1 // pred_region
      %157 = vsyncadd [#allocation18], 0
      %s158 = sshll.u32 %s13, 4
      %s159 = int_to_ptr.hbm [resolvable:$true] %s158
      %s160 = sshll.u32 [#allocation17], 4
      %s161 = int_to_ptr.vmem [resolvable:$true] %s160
      %166 = dma.hbm_to_vmem [thread:$0]  %s159, 128, %s161, [#allocation18], 64, 64, 4
    $region57: #{tpu_custom_call.1} parent=1 // pred_fallthru
      _
    // Predicated region
    $region58: #{tpu_custom_call.1} parent=1 // pred_check
      _
    $region59: #{tpu_custom_call.1} parent=1 // pred_check_branch
      %168 = sbr.rel (0) target = $region61
    $region60: #{tpu_custom_call.1} parent=1 // pred_region
      %170 = vsyncadd [#allocation18], 0
      %s171 = sshll.u32 %s14, 4
      %s172 = int_to_ptr.hbm [resolvable:$true] %s171
      %s173 = sshll.u32 [#allocation19], 4
      %s174 = int_to_ptr.vmem [resolvable:$true] %s173
      %179 = dma.hbm_to_vmem [thread:$0]  %s172, 128, %s174, [#allocation18], 64, 64, 4
    $region61: #{tpu_custom_call.1} parent=1 // pred_fallthru
      _
    // Predicated region
    $region62: #{tpu_custom_call.1} parent=1 // pred_check
      _
    $region63: #{tpu_custom_call.1} parent=1 // pred_check_branch
      %181 = sbr.rel (0) target = $region65
    $region64: #{tpu_custom_call.1} parent=1 // pred_region
      %183 = vsyncadd [#allocation21], 0
      %s184 = sshll.u32 %s15, 4
      %s185 = int_to_ptr.hbm [resolvable:$true] %s184
      %s186 = sshll.u32 [#allocation20], 4
      %s187 = int_to_ptr.vmem [resolvable:$true] %s186
      %192 = dma.hbm_to_vmem [thread:$0]  %s185, 3072, %s187, [#allocation21], 64, 64, 4
    $region65: #{tpu_custom_call.1} parent=1 // pred_fallthru
      _
    // Predicated region
    $region66: #{tpu_custom_call.1} parent=1 // pred_check
      _
    $region67: #{tpu_custom_call.1} parent=1 // pred_check_branch
      %194 = sbr.rel (0) target = $region69
    $region68: #{tpu_custom_call.1} parent=1 // pred_region
      %196 = vsyncadd [#allocation21], 0
      %s198 = sshll.u32 %s16, 4
      %s199 = int_to_ptr.hbm [resolvable:$true] %s198
      %s200 = sshll.u32 [#allocation22], 4
      %s201 = int_to_ptr.vmem [resolvable:$true] %s200
      %203 = dma.hbm_to_vmem [thread:$0]  %s199, 16, %s201, [#allocation21]
    $region69: #{tpu_custom_call.1} parent=1 // pred_fallthru
      _
    // Predicated region
    $region70: #{tpu_custom_call.1} parent=1 // pred_check
      _
    $region71: #{tpu_custom_call.1} parent=1 // pred_check_branch
      %205 = sbr.rel (0) target = $region73
    $region72: #{tpu_custom_call.1} parent=1 // pred_region
      %207 = vsyncadd [#allocation24], 0
      %s208 = sshll.u32 %s17, 4
      %s209 = int_to_ptr.hbm [resolvable:$true] %s208
      %s210 = sshll.u32 [#allocation23], 4
      %s211 = int_to_ptr.vmem [resolvable:$true] %s210
      %216 = dma.hbm_to_vmem [thread:$0]  %s209, 128, %s211, [#allocation24], 64, 64, 4
    $region73: #{tpu_custom_call.1} parent=1 // pred_fallthru
      _
    // Predicated region
    $region74: #{tpu_custom_call.1} parent=1 // pred_check
      _
    $region75: #{tpu_custom_call.1} parent=1 // pred_check_branch
      %218 = sbr.rel (0) target = $region77
    $region76: #{tpu_custom_call.1} parent=1 // pred_region
      _
    $region77: #{tpu_custom_call.1} parent=1 // pred_fallthru
      _
    // Predicated region
    $region78: #{tpu_custom_call.1} parent=1 // pred_check
      _
    $region79: #{tpu_custom_call.1} parent=1 // pred_check_branch
      %220 = sbr.rel (0) target = $region81
    $region80: #{tpu_custom_call.1} parent=1 // pred_region
      %222 = dma.done [#allocation3], 512
    $region81: #{tpu_custom_call.1} parent=1 // pred_fallthru
      _
    // Predicated region
    $region82: #{tpu_custom_call.1} parent=1 // pred_check
      _
    $region83: #{tpu_custom_call.1} parent=1 // pred_check_branch
      %224 = sbr.rel (0) target = $region85
    $region84: #{tpu_custom_call.1} parent=1 // pred_region
      %226 = dma.done [#allocation6], 3072
    $region85: #{tpu_custom_call.1} parent=1 // pred_fallthru
      _
    // Predicated region
    $region86: #{tpu_custom_call.1} parent=1 // pred_check
      _
    $region87: #{tpu_custom_call.1} parent=1 // pred_check_branch
      %228 = sbr.rel (0) target = $region89
    $region88: #{tpu_custom_call.1} parent=1 // pred_region
      %230 = dma.done [#allocation6], 256
    $region89: #{tpu_custom_call.1} parent=1 // pred_fallthru
      _
    // Predicated region
    $region90: #{tpu_custom_call.1} parent=1 // pred_check
      _
    $region91: #{tpu_custom_call.1} parent=1 // pred_check_branch
      %232 = sbr.rel (0) target = $region93
    $region92: #{tpu_custom_call.1} parent=1 // pred_region
      %234 = dma.done [#allocation9], 256
    $region93: #{tpu_custom_call.1} parent=1 // pred_fallthru
      _
    // Predicated region
    $region94: #{tpu_custom_call.1} parent=1 // pred_check
      _
    $region95: #{tpu_custom_call.1} parent=1 // pred_check_branch
      %236 = sbr.rel (0) target = $region97
    $region96: #{tpu_custom_call.1} parent=1 // pred_region
      %238 = dma.done [#allocation9], 3072
    $region97: #{tpu_custom_call.1} parent=1 // pred_fallthru
      _
    // Predicated region
    $region98: #{tpu_custom_call.1} parent=1 // pred_check
      _
    $region99: #{tpu_custom_call.1} parent=1 // pred_check_branch
      %240 = sbr.rel (0) target = $region101
    $region100: #{tpu_custom_call.1} parent=1 // pred_region
      %242 = dma.done [#allocation12], 16
    $region101: #{tpu_custom_call.1} parent=1 // pred_fallthru
      _
    // Predicated region
    $region102: #{tpu_custom_call.1} parent=1 // pred_check
      _
    $region103: #{tpu_custom_call.1} parent=1 // pred_check_branch
      %244 = sbr.rel (0) target = $region105
    $region104: #{tpu_custom_call.1} parent=1 // pred_region
      %246 = dma.done [#allocation12], 256
    $region105: #{tpu_custom_call.1} parent=1 // pred_fallthru
      _
    // Predicated region
    $region106: #{tpu_custom_call.1} parent=1 // pred_check
      _
    $region107: #{tpu_custom_call.1} parent=1 // pred_check_branch
      %248 = sbr.rel (0) target = $region109
    $region108: #{tpu_custom_call.1} parent=1 // pred_region
      %250 = dma.done [#allocation15], 256
    $region109: #{tpu_custom_call.1} parent=1 // pred_fallthru
      _
    // Predicated region
    $region110: #{tpu_custom_call.1} parent=1 // pred_check
      _
    $region111: #{tpu_custom_call.1} parent=1 // pred_check_branch
      %252 = sbr.rel (0) target = $region113
    $region112: #{tpu_custom_call.1} parent=1 // pred_region
      %254 = dma.done [#allocation15], 16
    $region113: #{tpu_custom_call.1} parent=1 // pred_fallthru
      _
    // Predicated region
    $region114: #{tpu_custom_call.1} parent=1 // pred_check
      _
    $region115: #{tpu_custom_call.1} parent=1 // pred_check_branch
      %256 = sbr.rel (0) target = $region117
    $region116: #{tpu_custom_call.1} parent=1 // pred_region
      %258 = dma.done [#allocation18], 128
    $region117: #{tpu_custom_call.1} parent=1 // pred_fallthru
      _
    // Predicated region
    $region118: #{tpu_custom_call.1} parent=1 // pred_check
      _
    $region119: #{tpu_custom_call.1} parent=1 // pred_check_branch
      %260 = sbr.rel (0) target = $region121
    $region120: #{tpu_custom_call.1} parent=1 // pred_region
      %262 = dma.done [#allocation18], 128
    $region121: #{tpu_custom_call.1} parent=1 // pred_fallthru
      _
    // Predicated region
    $region122: #{tpu_custom_call.1} parent=1 // pred_check
      _
    $region123: #{tpu_custom_call.1} parent=1 // pred_check_branch
      %264 = sbr.rel (0) target = $region125
    $region124: #{tpu_custom_call.1} parent=1 // pred_region
      %266 = dma.done [#allocation21], 3072
    $region125: #{tpu_custom_call.1} parent=1 // pred_fallthru
      _
    // Predicated region
    $region126: #{tpu_custom_call.1} parent=1 // pred_check
      _
    $region127: #{tpu_custom_call.1} parent=1 // pred_check_branch
      %268 = sbr.rel (0) target = $region129
    $region128: #{tpu_custom_call.1} parent=1 // pred_region
      %270 = dma.done [#allocation21], 16
    $region129: #{tpu_custom_call.1} parent=1 // pred_fallthru
      _
    // Predicated region
    $region130: #{tpu_custom_call.1} parent=1 // pred_check
      _
    $region131: #{tpu_custom_call.1} parent=1 // pred_check_branch
      %272 = sbr.rel (0) target = $region133
    $region132: #{tpu_custom_call.1} parent=1 // pred_region
      %274 = dma.done [#allocation24], 128
    $region133: #{tpu_custom_call.1} parent=1 // pred_fallthru
      _
    %v276 = vld [vmem:[#allocation2] sm:$0xff]
    %v277 = vld [vmem:[#allocation2 + $0x8] sm:$0xff]
    %v278 = vld [vmem:[#allocation2 + $0x10] sm:$0xff]
    %v279 = vld [vmem:[#allocation2 + $0x18] sm:$0xff]
    %v280 = vpack.c.bf16 %v277, %v276
    %v281 = vpack.c.bf16 %v279, %v278
    %v282 = vld [vmem:[#allocation7] sm:$0xf]
    %v283 = vld [vmem:[#allocation7 + $0x4] sm:$0xf]
    %v284 = vld [vmem:[#allocation7 + $0x8] sm:$0xf]
    %v285 = vld [vmem:[#allocation7 + $0xc] sm:$0xf]
    %v290 = vunpack.c.l.b16 %v282
    %v291 = vunpack.c.l.b16 %v283
    %v292 = vunpack.c.l.b16 %v284
    %v293 = vunpack.c.l.b16 %v285
    %v294 = vpack.c.b16 %v291, %v290
    %v295 = vpack.c.b16 %v293, %v292
    %vm296 = vcmask 261120
    %v298 = vsel %vm296, %v294, 0
    %v301 = vsel %vm296, %v295, 0
    %303 = vmatpush.bf16.msra.mxu0 0
    %304 = vmatpush.bf16.msra.mxu0 0
    %305 = vmatpush.bf16.msra.mxu0 0
    %306 = vmatpush.bf16.msra.mxu0 0
    %307 = vmatpush.bf16.msra.mxu0 0
    %308 = vmatpush.bf16.msra.mxu0 0
    %309 = vmatpush.bf16.msra.mxu0 %v281
    %310 = vmatpush.bf16.msra.mxu0 %v280
    %311 = vmatmul.bf16.gmra.mxu0 %v298
    %v312 = vpop.f32.mrf.mxu0
    %v313 = vadd.f32 0.0, %v312
    %v314 = vpop.f32.mrf.mxu0
    %v315 = vadd.f32 0.0, %v314
    %316 = vmatmul.bf16.gmra.mxu0 %v301
    %v317 = vpop.f32.mrf.mxu0
    %v318 = vadd.f32 0.0, %v317
    %v319 = vpop.f32.mrf.mxu0
    %v320 = vadd.f32 0.0, %v319
    %321 = vdwg.mxu0
    %v322 = vpack.c.bf16 %v315, %v313
    %v323 = vpack.c.bf16 %v320, %v318
    %v324 = vld [vmem:[#allocation8] sm:$0xf]
    %v325 = vld [vmem:[#allocation8 + $0x4] sm:$0xf]
    %v326 = vld [vmem:[#allocation8 + $0x8] sm:$0xf]
    %v327 = vld [vmem:[#allocation8 + $0xc] sm:$0xf]
    %v332 = vunpack.c.l.b16 %v324
    %v333 = vunpack.c.l.b16 %v325
    %v334 = vunpack.c.l.b16 %v326
    %v335 = vunpack.c.l.b16 %v327
    %v336 = vpack.c.b16 %v333, %v332
    %v337 = vpack.c.b16 %v335, %v334
    %v339 = vsel %vm296, %v336, 0
    %v342 = vsel %vm296, %v337, 0
    %344 = vmatpush.bf16.msra.mxu0 0
    %345 = vmatpush.bf16.msra.mxu0 0
    %346 = vmatpush.bf16.msra.mxu0 0
    %347 = vmatpush.bf16.msra.mxu0 0
    %348 = vmatpush.bf16.msra.mxu0 0
    %349 = vmatpush.bf16.msra.mxu0 0
    %350 = vmatpush.bf16.msra.mxu0 %v281
    %351 = vmatpush.bf16.msra.mxu0 %v280
    %352 = vmatmul.bf16.gmra.mxu0 %v339
    %v353 = vpop.f32.mrf.mxu0
    %v354 = vadd.f32 0.0, %v353
    %v355 = vpop.f32.mrf.mxu0
    %v356 = vadd.f32 0.0, %v355
    %357 = vmatmul.bf16.gmra.mxu0 %v342
    %v358 = vpop.f32.mrf.mxu0
    %v359 = vadd.f32 0.0, %v358
    %v360 = vpop.f32.mrf.mxu0
    %v361 = vadd.f32 0.0, %v360
    %362 = vdwg.mxu0
    %v363 = vpack.c.bf16 %v356, %v354
    %v364 = vpack.c.bf16 %v361, %v359
    %v365 = vld [vmem:[#allocation5] sm:$0xf]
    %v366 = vld [vmem:[#allocation5 + $0x4] sm:$0xf]
    %v367 = vld [vmem:[#allocation5 + $0x8] sm:$0xf]
    %v368 = vld [vmem:[#allocation5 + $0xc] sm:$0xf]
    %v369 = vld [vmem:[#allocation5 + $0x10] sm:$0xf]
    %v370 = vld [vmem:[#allocation5 + $0x14] sm:$0xf]
    %v371 = vld [vmem:[#allocation5 + $0x18] sm:$0xf]
    %v372 = vld [vmem:[#allocation5 + $0x1c] sm:$0xf]
    %v373 = vld [vmem:[#allocation5 + $0x20] sm:$0xf]
    %v374 = vld [vmem:[#allocation5 + $0x24] sm:$0xf]
    %v375 = vld [vmem:[#allocation5 + $0x28] sm:$0xf]
    %v376 = vld [vmem:[#allocation5 + $0x2c] sm:$0xf]
    %v377 = vld [vmem:[#allocation5 + $0x30] sm:$0xf]
    %v378 = vld [vmem:[#allocation5 + $0x34] sm:$0xf]
    %v379 = vld [vmem:[#allocation5 + $0x38] sm:$0xf]
    %v380 = vld [vmem:[#allocation5 + $0x3c] sm:$0xf]
    %s381 = scalar_lea.vmem [#allocation5], 64
    %v382 = vld [vmem:[%s381] sm:$0xf]
    %v383 = vld [vmem:[%s381 + $0x4] sm:$0xf]
    %v384 = vld [vmem:[%s381 + $0x8] sm:$0xf]
    %v385 = vld [vmem:[%s381 + $0xc] sm:$0xf]
    %v386 = vld [vmem:[%s381 + $0x10] sm:$0xf]
    %v387 = vld [vmem:[%s381 + $0x14] sm:$0xf]
    %v388 = vld [vmem:[%s381 + $0x18] sm:$0xf]
    %v389 = vld [vmem:[%s381 + $0x1c] sm:$0xf]
    %v390 = vld [vmem:[%s381 + $0x20] sm:$0xf]
    %v391 = vld [vmem:[%s381 + $0x24] sm:$0xf]
    %v392 = vld [vmem:[%s381 + $0x28] sm:$0xf]
    %v393 = vld [vmem:[%s381 + $0x2c] sm:$0xf]
    %v394 = vld [vmem:[%s381 + $0x30] sm:$0xf]
    %v395 = vld [vmem:[%s381 + $0x34] sm:$0xf]
    %v396 = vld [vmem:[%s381 + $0x38] sm:$0xf]
    %v397 = vld [vmem:[%s381 + $0x3c] sm:$0xf]
    %v414 = vunpack.c.l.b16 %v382
    %v415 = vunpack.c.l.b16 %v383
    %v416 = vunpack.c.l.b16 %v384
    %v417 = vunpack.c.l.b16 %v385
    %v418 = vunpack.c.l.b16 %v386
    %v419 = vunpack.c.l.b16 %v387
    %v420 = vunpack.c.l.b16 %v388
    %v421 = vunpack.c.l.b16 %v389
    %v422 = vunpack.c.l.b16 %v390
    %v423 = vunpack.c.l.b16 %v391
    %v424 = vunpack.c.l.b16 %v392
    %v425 = vunpack.c.l.b16 %v393
    %v426 = vunpack.c.l.b16 %v394
    %v427 = vunpack.c.l.b16 %v395
    %v428 = vunpack.c.l.b16 %v396
    %v429 = vunpack.c.l.b16 %v397
    %v430 = vpack.c.b16 %v415, %v414
    %v431 = vpack.c.b16 %v417, %v416
    %v432 = vpack.c.b16 %v419, %v418
    %v433 = vpack.c.b16 %v421, %v420
    %v434 = vpack.c.b16 %v423, %v422
    %v435 = vpack.c.b16 %v425, %v424
    %v436 = vpack.c.b16 %v427, %v426
    %v437 = vpack.c.b16 %v429, %v428
    %446 = vmatpush.bf16.msra.mxu0 %v437
    %447 = vmatpush.bf16.msra.mxu0 %v436
    %448 = vmatpush.bf16.msra.mxu0 %v435
    %449 = vmatpush.bf16.msra.mxu0 %v434
    %450 = vmatpush.bf16.msra.mxu0 %v433
    %451 = vmatpush.bf16.msra.mxu0 %v432
    %452 = vmatpush.bf16.msra.mxu0 %v431
    %453 = vmatpush.bf16.msra.mxu0 %v430
    %454 = vmatmul.bf16.gmra.mxu0 %v280
    %v455 = vpop.f32.mrf.mxu0
    %v456 = vadd.f32 0.0, %v455
    %v457 = vpop.f32.mrf.mxu0
    %v458 = vadd.f32 0.0, %v457
    %459 = vmatmul.bf16.gmra.mxu0 %v281
    %v460 = vpop.f32.mrf.mxu0
    %v461 = vadd.f32 0.0, %v460
    %v462 = vpop.f32.mrf.mxu0
    %v463 = vadd.f32 0.0, %v462
    %464 = vdwg.mxu0
    %v481 = vunpack.c.l.b16 %v365
    %v482 = vunpack.c.l.b16 %v366
    %v483 = vunpack.c.l.b16 %v367
    %v484 = vunpack.c.l.b16 %v368
    %v485 = vunpack.c.l.b16 %v369
    %v486 = vunpack.c.l.b16 %v370
    %v487 = vunpack.c.l.b16 %v371
    %v488 = vunpack.c.l.b16 %v372
    %v489 = vunpack.c.l.b16 %v373
    %v490 = vunpack.c.l.b16 %v374
    %v491 = vunpack.c.l.b16 %v375
    %v492 = vunpack.c.l.b16 %v376
    %v493 = vunpack.c.l.b16 %v377
    %v494 = vunpack.c.l.b16 %v378
    %v495 = vunpack.c.l.b16 %v379
    %v496 = vunpack.c.l.b16 %v380
    %v497 = vpack.c.b16 %v482, %v481
    %v498 = vpack.c.b16 %v484, %v483
    %v499 = vpack.c.b16 %v486, %v485
    %v500 = vpack.c.b16 %v488, %v487
    %v501 = vpack.c.b16 %v490, %v489
    %v502 = vpack.c.b16 %v492, %v491
    %v503 = vpack.c.b16 %v494, %v493
    %v504 = vpack.c.b16 %v496, %v495
    %513 = vmatpush.bf16.msra.mxu0 %v504
    %514 = vmatpush.bf16.msra.mxu0 %v503
    %515 = vmatpush.bf16.msra.mxu0 %v502
    %516 = vmatpush.bf16.msra.mxu0 %v501
    %517 = vmatpush.bf16.msra.mxu0 %v500
    %518 = vmatpush.bf16.msra.mxu0 %v499
    %519 = vmatpush.bf16.msra.mxu0 %v498
    %520 = vmatpush.bf16.msra.mxu0 %v497
    %521 = vmatmul.bf16.gmra.mxu0 %v322
    %v522 = vpop.f32.mrf.mxu0
    %v523 = vadd.f32 %v456, %v522
    %v524 = vpop.f32.mrf.mxu0
    %v525 = vadd.f32 %v458, %v524
    %526 = vmatmul.bf16.gmra.mxu0 %v323
    %v527 = vpop.f32.mrf.mxu0
    %v528 = vadd.f32 %v461, %v527
    %v529 = vpop.f32.mrf.mxu0
    %v530 = vadd.f32 %v463, %v529
    %531 = vdwg.mxu0
    %s532 = scalar_lea.vmem [#allocation5], 128
    %v533 = vld [vmem:[%s532] sm:$0xf]
    %v534 = vld [vmem:[%s532 + $0x4] sm:$0xf]
    %v535 = vld [vmem:[%s532 + $0x8] sm:$0xf]
    %v536 = vld [vmem:[%s532 + $0xc] sm:$0xf]
    %v537 = vld [vmem:[%s532 + $0x10] sm:$0xf]
    %v538 = vld [vmem:[%s532 + $0x14] sm:$0xf]
    %v539 = vld [vmem:[%s532 + $0x18] sm:$0xf]
    %v540 = vld [vmem:[%s532 + $0x1c] sm:$0xf]
    %v541 = vld [vmem:[%s532 + $0x20] sm:$0xf]
    %v542 = vld [vmem:[%s532 + $0x24] sm:$0xf]
    %v543 = vld [vmem:[%s532 + $0x28] sm:$0xf]
    %v544 = vld [vmem:[%s532 + $0x2c] sm:$0xf]
    %v545 = vld [vmem:[%s532 + $0x30] sm:$0xf]
    %v546 = vld [vmem:[%s532 + $0x34] sm:$0xf]
    %v547 = vld [vmem:[%s532 + $0x38] sm:$0xf]
    %v548 = vld [vmem:[%s532 + $0x3c] sm:$0xf]
    %v565 = vunpack.c.l.b16 %v533
    %v566 = vunpack.c.l.b16 %v534
    %v567 = vunpack.c.l.b16 %v535
    %v568 = vunpack.c.l.b16 %v536
    %v569 = vunpack.c.l.b16 %v537
    %v570 = vunpack.c.l.b16 %v538
    %v571 = vunpack.c.l.b16 %v539
    %v572 = vunpack.c.l.b16 %v540
    %v573 = vunpack.c.l.b16 %v541
    %v574 = vunpack.c.l.b16 %v542
    %v575 = vunpack.c.l.b16 %v543
    %v576 = vunpack.c.l.b16 %v544
    %v577 = vunpack.c.l.b16 %v545
    %v578 = vunpack.c.l.b16 %v546
    %v579 = vunpack.c.l.b16 %v547
    %v580 = vunpack.c.l.b16 %v548
    %v581 = vpack.c.b16 %v566, %v565
    %v582 = vpack.c.b16 %v568, %v567
    %v583 = vpack.c.b16 %v570, %v569
    %v584 = vpack.c.b16 %v572, %v571
    %v585 = vpack.c.b16 %v574, %v573
    %v586 = vpack.c.b16 %v576, %v575
    %v587 = vpack.c.b16 %v578, %v577
    %v588 = vpack.c.b16 %v580, %v579
    %597 = vmatpush.bf16.msra.mxu0 %v588
    %598 = vmatpush.bf16.msra.mxu0 %v587
    %599 = vmatpush.bf16.msra.mxu0 %v586
    %600 = vmatpush.bf16.msra.mxu0 %v585
    %601 = vmatpush.bf16.msra.mxu0 %v584
    %602 = vmatpush.bf16.msra.mxu0 %v583
    %603 = vmatpush.bf16.msra.mxu0 %v582
    %604 = vmatpush.bf16.msra.mxu0 %v581
    %605 = vmatmul.bf16.gmra.mxu0 %v363
    %v606 = vpop.f32.mrf.mxu0
    %v607 = vadd.f32 0.0, %v606
    %v608 = vpop.f32.mrf.mxu0
    %v609 = vadd.f32 0.0, %v608
    %610 = vmatmul.bf16.gmra.mxu0 %v364
    %v611 = vpop.f32.mrf.mxu0
    %v612 = vadd.f32 0.0, %v611
    %v613 = vpop.f32.mrf.mxu0
    %v614 = vadd.f32 0.0, %v613
    %615 = vdwg.mxu0
    %v616 = vadd.f32 %v523, %v607
    %v617 = vadd.f32 %v525, %v609
    %v618 = vadd.f32 %v528, %v612
    %v619 = vadd.f32 %v530, %v614
    %v620 = vld [vmem:[%s2] sm:$0x1]
    %v622 = vperm.slane %v620, 0
    %v624 = vadd.f32 %v616, %v622
    %v625 = vadd.f32 %v617, %v622
    %v626 = vadd.f32 %v618, %v622
    %v627 = vadd.f32 %v619, %v622
    %v628 = vmax.f32 %v624, 0.0
    %v629 = vmax.f32 %v625, 0.0
    %v630 = vmax.f32 %v626, 0.0
    %v631 = vmax.f32 %v627, 0.0
    %v632 = vpack.c.bf16 %v629, %v628
    %v633 = vpack.c.bf16 %v631, %v630
    %v634 = vld [vmem:[#allocation13] sm:$0xf]
    %v635 = vld [vmem:[#allocation13 + $0x4] sm:$0xf]
    %v636 = vld [vmem:[#allocation13 + $0x8] sm:$0xf]
    %v637 = vld [vmem:[#allocation13 + $0xc] sm:$0xf]
    %v642 = vunpack.c.l.b16 %v634
    %v643 = vunpack.c.l.b16 %v635
    %v644 = vunpack.c.l.b16 %v636
    %v645 = vunpack.c.l.b16 %v637
    %v646 = vpack.c.b16 %v643, %v642
    %v647 = vpack.c.b16 %v645, %v644
    %v649 = vsel %vm296, %v646, 0
    %v652 = vsel %vm296, %v647, 0
    %654 = vmatpush.bf16.msra.mxu0 0
    %655 = vmatpush.bf16.msra.mxu0 0
    %656 = vmatpush.bf16.msra.mxu0 0
    %657 = vmatpush.bf16.msra.mxu0 0
    %658 = vmatpush.bf16.msra.mxu0 0
    %659 = vmatpush.bf16.msra.mxu0 0
    %660 = vmatpush.bf16.msra.mxu0 %v633
    %661 = vmatpush.bf16.msra.mxu0 %v632
    %662 = vmatmul.bf16.gmra.mxu0 %v649
    %v663 = vpop.f32.mrf.mxu0
    %v664 = vadd.f32 0.0, %v663
    %v665 = vpop.f32.mrf.mxu0
    %v666 = vadd.f32 0.0, %v665
    %667 = vmatmul.bf16.gmra.mxu0 %v652
    %v668 = vpop.f32.mrf.mxu0
    %v669 = vadd.f32 0.0, %v668
    %v670 = vpop.f32.mrf.mxu0
    %v671 = vadd.f32 0.0, %v670
    %672 = vdwg.mxu0
    %v673 = vpack.c.bf16 %v666, %v664
    %v674 = vpack.c.bf16 %v671, %v669
    %v675 = vld [vmem:[#allocation14] sm:$0xf]
    %v676 = vld [vmem:[#allocation14 + $0x4] sm:$0xf]
    %v677 = vld [vmem:[#allocation14 + $0x8] sm:$0xf]
    %v678 = vld [vmem:[#allocation14 + $0xc] sm:$0xf]
    %v683 = vunpack.c.l.b16 %v675
    %v684 = vunpack.c.l.b16 %v676
    %v685 = vunpack.c.l.b16 %v677
    %v686 = vunpack.c.l.b16 %v678
    %v687 = vpack.c.b16 %v684, %v683
    %v688 = vpack.c.b16 %v686, %v685
    %v690 = vsel %vm296, %v687, 0
    %v693 = vsel %vm296, %v688, 0
    %695 = vmatpush.bf16.msra.mxu0 0
    %696 = vmatpush.bf16.msra.mxu0 0
    %697 = vmatpush.bf16.msra.mxu0 0
    %698 = vmatpush.bf16.msra.mxu0 0
    %699 = vmatpush.bf16.msra.mxu0 0
    %700 = vmatpush.bf16.msra.mxu0 0
    %701 = vmatpush.bf16.msra.mxu0 %v633
    %702 = vmatpush.bf16.msra.mxu0 %v632
    %703 = vmatmul.bf16.gmra.mxu0 %v690
    %v704 = vpop.f32.mrf.mxu0
    %v705 = vadd.f32 0.0, %v704
    %v706 = vpop.f32.mrf.mxu0
    %v707 = vadd.f32 0.0, %v706
    %708 = vmatmul.bf16.gmra.mxu0 %v693
    %v709 = vpop.f32.mrf.mxu0
    %v710 = vadd.f32 0.0, %v709
    %v711 = vpop.f32.mrf.mxu0
    %v712 = vadd.f32 0.0, %v711
    %713 = vdwg.mxu0
    %v714 = vpack.c.bf16 %v707, %v705
    %v715 = vpack.c.bf16 %v712, %v710
    %v716 = vld [vmem:[#allocation10] sm:$0xf]
    %v717 = vld [vmem:[#allocation10 + $0x4] sm:$0xf]
    %v718 = vld [vmem:[#allocation10 + $0x8] sm:$0xf]
    %v719 = vld [vmem:[#allocation10 + $0xc] sm:$0xf]
    %v720 = vld [vmem:[#allocation10 + $0x10] sm:$0xf]
    %v721 = vld [vmem:[#allocation10 + $0x14] sm:$0xf]
    %v722 = vld [vmem:[#allocation10 + $0x18] sm:$0xf]
    %v723 = vld [vmem:[#allocation10 + $0x1c] sm:$0xf]
    %v724 = vld [vmem:[#allocation10 + $0x20] sm:$0xf]
    %v725 = vld [vmem:[#allocation10 + $0x24] sm:$0xf]
    %v726 = vld [vmem:[#allocation10 + $0x28] sm:$0xf]
    %v727 = vld [vmem:[#allocation10 + $0x2c] sm:$0xf]
    %v728 = vld [vmem:[#allocation10 + $0x30] sm:$0xf]
    %v729 = vld [vmem:[#allocation10 + $0x34] sm:$0xf]
    %v730 = vld [vmem:[#allocation10 + $0x38] sm:$0xf]
    %v731 = vld [vmem:[#allocation10 + $0x3c] sm:$0xf]
    %s732 = scalar_lea.vmem [#allocation10], 64
    %v733 = vld [vmem:[%s732] sm:$0xf]
    %v734 = vld [vmem:[%s732 + $0x4] sm:$0xf]
    %v735 = vld [vmem:[%s732 + $0x8] sm:$0xf]
    %v736 = vld [vmem:[%s732 + $0xc] sm:$0xf]
    %v737 = vld [vmem:[%s732 + $0x10] sm:$0xf]
    %v738 = vld [vmem:[%s732 + $0x14] sm:$0xf]
    %v739 = vld [vmem:[%s732 + $0x18] sm:$0xf]
    %v740 = vld [vmem:[%s732 + $0x1c] sm:$0xf]
    %v741 = vld [vmem:[%s732 + $0x20] sm:$0xf]
    %v742 = vld [vmem:[%s732 + $0x24] sm:$0xf]
    %v743 = vld [vmem:[%s732 + $0x28] sm:$0xf]
    %v744 = vld [vmem:[%s732 + $0x2c] sm:$0xf]
    %v745 = vld [vmem:[%s732 + $0x30] sm:$0xf]
    %v746 = vld [vmem:[%s732 + $0x34] sm:$0xf]
    %v747 = vld [vmem:[%s732 + $0x38] sm:$0xf]
    %v748 = vld [vmem:[%s732 + $0x3c] sm:$0xf]
    %v765 = vunpack.c.l.b16 %v733
    %v766 = vunpack.c.l.b16 %v734
    %v767 = vunpack.c.l.b16 %v735
    %v768 = vunpack.c.l.b16 %v736
    %v769 = vunpack.c.l.b16 %v737
    %v770 = vunpack.c.l.b16 %v738
    %v771 = vunpack.c.l.b16 %v739
    %v772 = vunpack.c.l.b16 %v740
    %v773 = vunpack.c.l.b16 %v741
    %v774 = vunpack.c.l.b16 %v742
    %v775 = vunpack.c.l.b16 %v743
    %v776 = vunpack.c.l.b16 %v744
    %v777 = vunpack.c.l.b16 %v745
    %v778 = vunpack.c.l.b16 %v746
    %v779 = vunpack.c.l.b16 %v747
    %v780 = vunpack.c.l.b16 %v748
    %v781 = vpack.c.b16 %v766, %v765
    %v782 = vpack.c.b16 %v768, %v767
    %v783 = vpack.c.b16 %v770, %v769
    %v784 = vpack.c.b16 %v772, %v771
    %v785 = vpack.c.b16 %v774, %v773
    %v786 = vpack.c.b16 %v776, %v775
    %v787 = vpack.c.b16 %v778, %v777
    %v788 = vpack.c.b16 %v780, %v779
    %797 = vmatpush.bf16.msra.mxu0 %v788
    %798 = vmatpush.bf16.msra.mxu0 %v787
    %799 = vmatpush.bf16.msra.mxu0 %v786
    %800 = vmatpush.bf16.msra.mxu0 %v785
    %801 = vmatpush.bf16.msra.mxu0 %v784
    %802 = vmatpush.bf16.msra.mxu0 %v783
    %803 = vmatpush.bf16.msra.mxu0 %v782
    %804 = vmatpush.bf16.msra.mxu0 %v781
    %805 = vmatmul.bf16.gmra.mxu0 %v632
    %v806 = vpop.f32.mrf.mxu0
    %v807 = vadd.f32 0.0, %v806
    %v808 = vpop.f32.mrf.mxu0
    %v809 = vadd.f32 0.0, %v808
    %810 = vmatmul.bf16.gmra.mxu0 %v633
    %v811 = vpop.f32.mrf.mxu0
    %v812 = vadd.f32 0.0, %v811
    %v813 = vpop.f32.mrf.mxu0
    %v814 = vadd.f32 0.0, %v813
    %815 = vdwg.mxu0
    %v832 = vunpack.c.l.b16 %v716
    %v833 = vunpack.c.l.b16 %v717
    %v834 = vunpack.c.l.b16 %v718
    %v835 = vunpack.c.l.b16 %v719
    %v836 = vunpack.c.l.b16 %v720
    %v837 = vunpack.c.l.b16 %v721
    %v838 = vunpack.c.l.b16 %v722
    %v839 = vunpack.c.l.b16 %v723
    %v840 = vunpack.c.l.b16 %v724
    %v841 = vunpack.c.l.b16 %v725
    %v842 = vunpack.c.l.b16 %v726
    %v843 = vunpack.c.l.b16 %v727
    %v844 = vunpack.c.l.b16 %v728
    %v845 = vunpack.c.l.b16 %v729
    %v846 = vunpack.c.l.b16 %v730
    %v847 = vunpack.c.l.b16 %v731
    %v848 = vpack.c.b16 %v833, %v832
    %v849 = vpack.c.b16 %v835, %v834
    %v850 = vpack.c.b16 %v837, %v836
    %v851 = vpack.c.b16 %v839, %v838
    %v852 = vpack.c.b16 %v841, %v840
    %v853 = vpack.c.b16 %v843, %v842
    %v854 = vpack.c.b16 %v845, %v844
    %v855 = vpack.c.b16 %v847, %v846
    %864 = vmatpush.bf16.msra.mxu0 %v855
    %865 = vmatpush.bf16.msra.mxu0 %v854
    %866 = vmatpush.bf16.msra.mxu0 %v853
    %867 = vmatpush.bf16.msra.mxu0 %v852
    %868 = vmatpush.bf16.msra.mxu0 %v851
    %869 = vmatpush.bf16.msra.mxu0 %v850
    %870 = vmatpush.bf16.msra.mxu0 %v849
    %871 = vmatpush.bf16.msra.mxu0 %v848
    %872 = vmatmul.bf16.gmra.mxu0 %v673
    %v873 = vpop.f32.mrf.mxu0
    %v874 = vadd.f32 %v807, %v873
    %v875 = vpop.f32.mrf.mxu0
    %v876 = vadd.f32 %v809, %v875
    %877 = vmatmul.bf16.gmra.mxu0 %v674
    %v878 = vpop.f32.mrf.mxu0
    %v879 = vadd.f32 %v812, %v878
    %v880 = vpop.f32.mrf.mxu0
    %v881 = vadd.f32 %v814, %v880
    %882 = vdwg.mxu0
    %s883 = scalar_lea.vmem [#allocation10], 128
    %v884 = vld [vmem:[%s883] sm:$0xf]
    %v885 = vld [vmem:[%s883 + $0x4] sm:$0xf]
    %v886 = vld [vmem:[%s883 + $0x8] sm:$0xf]
    %v887 = vld [vmem:[%s883 + $0xc] sm:$0xf]
    %v888 = vld [vmem:[%s883 + $0x10] sm:$0xf]
    %v889 = vld [vmem:[%s883 + $0x14] sm:$0xf]
    %v890 = vld [vmem:[%s883 + $0x18] sm:$0xf]
    %v891 = vld [vmem:[%s883 + $0x1c] sm:$0xf]
    %v892 = vld [vmem:[%s883 + $0x20] sm:$0xf]
    %v893 = vld [vmem:[%s883 + $0x24] sm:$0xf]
    %v894 = vld [vmem:[%s883 + $0x28] sm:$0xf]
    %v895 = vld [vmem:[%s883 + $0x2c] sm:$0xf]
    %v896 = vld [vmem:[%s883 + $0x30] sm:$0xf]
    %v897 = vld [vmem:[%s883 + $0x34] sm:$0xf]
    %v898 = vld [vmem:[%s883 + $0x38] sm:$0xf]
    %v899 = vld [vmem:[%s883 + $0x3c] sm:$0xf]
    %v916 = vunpack.c.l.b16 %v884
    %v917 = vunpack.c.l.b16 %v885
    %v918 = vunpack.c.l.b16 %v886
    %v919 = vunpack.c.l.b16 %v887
    %v920 = vunpack.c.l.b16 %v888
    %v921 = vunpack.c.l.b16 %v889
    %v922 = vunpack.c.l.b16 %v890
    %v923 = vunpack.c.l.b16 %v891
    %v924 = vunpack.c.l.b16 %v892
    %v925 = vunpack.c.l.b16 %v893
    %v926 = vunpack.c.l.b16 %v894
    %v927 = vunpack.c.l.b16 %v895
    %v928 = vunpack.c.l.b16 %v896
    %v929 = vunpack.c.l.b16 %v897
    %v930 = vunpack.c.l.b16 %v898
    %v931 = vunpack.c.l.b16 %v899
    %v932 = vpack.c.b16 %v917, %v916
    %v933 = vpack.c.b16 %v919, %v918
    %v934 = vpack.c.b16 %v921, %v920
    %v935 = vpack.c.b16 %v923, %v922
    %v936 = vpack.c.b16 %v925, %v924
    %v937 = vpack.c.b16 %v927, %v926
    %v938 = vpack.c.b16 %v929, %v928
    %v939 = vpack.c.b16 %v931, %v930
    %948 = vmatpush.bf16.msra.mxu0 %v939
    %949 = vmatpush.bf16.msra.mxu0 %v938
    %950 = vmatpush.bf16.msra.mxu0 %v937
    %951 = vmatpush.bf16.msra.mxu0 %v936
    %952 = vmatpush.bf16.msra.mxu0 %v935
    %953 = vmatpush.bf16.msra.mxu0 %v934
    %954 = vmatpush.bf16.msra.mxu0 %v933
    %955 = vmatpush.bf16.msra.mxu0 %v932
    %956 = vmatmul.bf16.gmra.mxu0 %v714
    %v957 = vpop.f32.mrf.mxu0
    %v958 = vadd.f32 0.0, %v957
    %v959 = vpop.f32.mrf.mxu0
    %v960 = vadd.f32 0.0, %v959
    %961 = vmatmul.bf16.gmra.mxu0 %v715
    %v962 = vpop.f32.mrf.mxu0
    %v963 = vadd.f32 0.0, %v962
    %v964 = vpop.f32.mrf.mxu0
    %v965 = vadd.f32 0.0, %v964
    %966 = vdwg.mxu0
    %v967 = vadd.f32 %v874, %v958
    %v968 = vadd.f32 %v876, %v960
    %v969 = vadd.f32 %v879, %v963
    %v970 = vadd.f32 %v881, %v965
    %v971 = vld [vmem:[#allocation11] sm:$0x1]
    %v973 = vperm.slane %v971, 0
    %v975 = vadd.f32 %v967, %v973
    %v976 = vadd.f32 %v968, %v973
    %v977 = vadd.f32 %v969, %v973
    %v978 = vadd.f32 %v970, %v973
    %v979 = vmax.f32 %v975, 0.0
    %v980 = vmax.f32 %v976, 0.0
    %v981 = vmax.f32 %v977, 0.0
    %v982 = vmax.f32 %v978, 0.0
    %v983 = vpack.c.bf16 %v980, %v979
    %v984 = vpack.c.bf16 %v982, %v981
    %v985 = vld [vmem:[%s9] sm:$0xf]
    %v986 = vld [vmem:[%s9 + $0x4] sm:$0xf]
    %v989 = vunpack.c.l.b16 %v985
    %v990 = vunpack.c.l.b16 %v986
    %v991 = vpack.c.b16 %v990, %v989
    %v993 = vsel %vm296, %v991, 0
    %995 = vmatpush.bf16.msra.mxu0 0
    %996 = vmatpush.bf16.msra.mxu0 0
    %997 = vmatpush.bf16.msra.mxu0 0
    %998 = vmatpush.bf16.msra.mxu0 0
    %999 = vmatpush.bf16.msra.mxu0 0
    %1000 = vmatpush.bf16.msra.mxu0 0
    %1001 = vmatpush.bf16.msra.mxu0 %v984
    %1002 = vmatpush.bf16.msra.mxu0 %v983
    %1003 = vmatmul.bf16.gmra.mxu0 %v993
    %v1004 = vpop.f32.mrf.mxu0
    %v1005 = vadd.f32 0.0, %v1004
    %v1006 = vpop.f32.mrf.mxu0
    %v1007 = vadd.f32 0.0, %v1006
    %1008 = vdwg.mxu0
    %v1009 = vpack.c.bf16 %v1007, %v1005
    %v1010 = vld [vmem:[%s10] sm:$0xf]
    %v1011 = vld [vmem:[%s10 + $0x4] sm:$0xf]
    %v1012 = vld [vmem:[%s10 + $0x8] sm:$0xf]
    %v1013 = vld [vmem:[%s10 + $0xc] sm:$0xf]
    %v1014 = vld [vmem:[%s10 + $0x10] sm:$0xf]
    %v1015 = vld [vmem:[%s10 + $0x14] sm:$0xf]
    %v1016 = vld [vmem:[%s10 + $0x18] sm:$0xf]
    %v1017 = vld [vmem:[%s10 + $0x1c] sm:$0xf]
    %v1018 = vld [vmem:[%s10 + $0x20] sm:$0xf]
    %v1019 = vld [vmem:[%s10 + $0x24] sm:$0xf]
    %v1020 = vld [vmem:[%s10 + $0x28] sm:$0xf]
    %v1021 = vld [vmem:[%s10 + $0x2c] sm:$0xf]
    %v1022 = vld [vmem:[%s10 + $0x30] sm:$0xf]
    %v1023 = vld [vmem:[%s10 + $0x34] sm:$0xf]
    %v1024 = vld [vmem:[%s10 + $0x38] sm:$0xf]
    %v1025 = vld [vmem:[%s10 + $0x3c] sm:$0xf]
    %v1042 = vunpack.c.l.b16 %v1010
    %v1043 = vunpack.c.l.b16 %v1011
    %v1044 = vunpack.c.l.b16 %v1012
    %v1045 = vunpack.c.l.b16 %v1013
    %v1046 = vunpack.c.l.b16 %v1014
    %v1047 = vunpack.c.l.b16 %v1015
    %v1048 = vunpack.c.l.b16 %v1016
    %v1049 = vunpack.c.l.b16 %v1017
    %v1050 = vunpack.c.l.b16 %v1018
    %v1051 = vunpack.c.l.b16 %v1019
    %v1052 = vunpack.c.l.b16 %v1020
    %v1053 = vunpack.c.l.b16 %v1021
    %v1054 = vunpack.c.l.b16 %v1022
    %v1055 = vunpack.c.l.b16 %v1023
    %v1056 = vunpack.c.l.b16 %v1024
    %v1057 = vunpack.c.l.b16 %v1025
    %v1058 = vpack.c.b16 %v1043, %v1042
    %v1059 = vpack.c.b16 %v1045, %v1044
    %v1060 = vpack.c.b16 %v1047, %v1046
    %v1061 = vpack.c.b16 %v1049, %v1048
    %v1062 = vpack.c.b16 %v1051, %v1050
    %v1063 = vpack.c.b16 %v1053, %v1052
    %v1064 = vpack.c.b16 %v1055, %v1054
    %v1065 = vpack.c.b16 %v1057, %v1056
    %1074 = vmatpush.bf16.msra.mxu0 %v1065
    %1075 = vmatpush.bf16.msra.mxu0 %v1064
    %1076 = vmatpush.bf16.msra.mxu0 %v1063
    %1077 = vmatpush.bf16.msra.mxu0 %v1062
    %1078 = vmatpush.bf16.msra.mxu0 %v1061
    %1079 = vmatpush.bf16.msra.mxu0 %v1060
    %1080 = vmatpush.bf16.msra.mxu0 %v1059
    %1081 = vmatpush.bf16.msra.mxu0 %v1058
    %1082 = vmatmul.bf16.gmra.mxu0 %v1009
    %v1083 = vpop.f32.mrf.mxu0
    %v1084 = vadd.f32 0.0, %v1083
    %v1085 = vpop.f32.mrf.mxu0
    %v1086 = vadd.f32 0.0, %v1085
    %1087 = vdwg.mxu0
    %v1088 = vpack.c.bf16 %v1086, %v1084
    %v1089 = vld [vmem:[#allocation17] sm:$0xf]
    %v1090 = vld [vmem:[#allocation17 + $0x4] sm:$0xf]
    %v1093 = vunpack.c.l.b16 %v1089
    %v1094 = vunpack.c.l.b16 %v1090
    %v1095 = vpack.c.b16 %v1094, %v1093
    %vm1096 = vcmask 130048
    %v1098 = vsel %vm1096, %v1095, 0
    %1100 = vmatpush.bf16.msra.mxu0 0
    %1101 = vmatpush.bf16.msra.mxu0 0
    %1102 = vmatpush.bf16.msra.mxu0 0
    %1103 = vmatpush.bf16.msra.mxu0 0
    %1104 = vmatpush.bf16.msra.mxu0 0
    %1105 = vmatpush.bf16.msra.mxu0 0
    %1106 = vmatpush.bf16.msra.mxu0 0
    %1107 = vmatpush.bf16.msra.mxu0 %v1088
    %1108 = vmatmul.bf16.gmra.mxu0 %v1098
    %v1109 = vpop.f32.mrf.mxu0
    %v1110 = vadd.f32 0.0, %v1109
    %v1111 = vpop.f32.mrf.mxu0
    %v1112 = vadd.f32 0.0, %v1111
    %1113 = vdwg.mxu0
    %v1114 = vpack.c.bf16 %v1112, %v1110
    %v1115 = vld [vmem:[#allocation19] sm:$0xf]
    %v1116 = vld [vmem:[#allocation19 + $0x4] sm:$0xf]
    %v1119 = vunpack.c.l.b16 %v1115
    %v1120 = vunpack.c.l.b16 %v1116
    %v1121 = vpack.c.b16 %v1120, %v1119
    %v1123 = vsel %vm1096, %v1121, 0
    %1125 = vmatpush.bf16.msra.mxu0 0
    %1126 = vmatpush.bf16.msra.mxu0 0
    %1127 = vmatpush.bf16.msra.mxu0 0
    %1128 = vmatpush.bf16.msra.mxu0 0
    %1129 = vmatpush.bf16.msra.mxu0 0
    %1130 = vmatpush.bf16.msra.mxu0 0
    %1131 = vmatpush.bf16.msra.mxu0 0
    %1132 = vmatpush.bf16.msra.mxu0 %v1088
    %1133 = vmatmul.bf16.gmra.mxu0 %v1123
    %v1134 = vpop.f32.mrf.mxu0
    %v1135 = vadd.f32 0.0, %v1134
    %v1136 = vpop.f32.mrf.mxu0
    %v1137 = vadd.f32 0.0, %v1136
    %1138 = vdwg.mxu0
    %v1139 = vpack.c.bf16 %v1137, %v1135
    %v1140 = vld [vmem:[%s11] sm:$0xf]
    %v1141 = vld [vmem:[%s11 + $0x4] sm:$0xf]
    %v1142 = vld [vmem:[%s11 + $0x8] sm:$0xf]
    %v1143 = vld [vmem:[%s11 + $0xc] sm:$0xf]
    %v1144 = vld [vmem:[%s11 + $0x10] sm:$0xf]
    %v1145 = vld [vmem:[%s11 + $0x14] sm:$0xf]
    %v1146 = vld [vmem:[%s11 + $0x18] sm:$0xf]
    %v1147 = vld [vmem:[%s11 + $0x1c] sm:$0xf]
    %s1148 = scalar_lea.vmem %s11, 32
    %v1149 = vld [vmem:[%s1148] sm:$0xf]
    %v1150 = vld [vmem:[%s1148 + $0x4] sm:$0xf]
    %v1151 = vld [vmem:[%s1148 + $0x8] sm:$0xf]
    %v1152 = vld [vmem:[%s1148 + $0xc] sm:$0xf]
    %v1153 = vld [vmem:[%s1148 + $0x10] sm:$0xf]
    %v1154 = vld [vmem:[%s1148 + $0x14] sm:$0xf]
    %v1155 = vld [vmem:[%s1148 + $0x18] sm:$0xf]
    %v1156 = vld [vmem:[%s1148 + $0x1c] sm:$0xf]
    %v1165 = vunpack.c.l.b16 %v1149
    %v1166 = vunpack.c.l.b16 %v1150
    %v1167 = vunpack.c.l.b16 %v1151
    %v1168 = vunpack.c.l.b16 %v1152
    %v1169 = vunpack.c.l.b16 %v1153
    %v1170 = vunpack.c.l.b16 %v1154
    %v1171 = vunpack.c.l.b16 %v1155
    %v1172 = vunpack.c.l.b16 %v1156
    %v1173 = vpack.c.b16 %v1166, %v1165
    %v1174 = vpack.c.b16 %v1168, %v1167
    %v1175 = vpack.c.b16 %v1170, %v1169
    %v1176 = vpack.c.b16 %v1172, %v1171
    %vm1181 = vcmask 523264
    %v1183 = vsel %vm1181, %v1088, 0
    %1185 = vmatpush.bf16.msra.mxu0 0
    %1186 = vmatpush.bf16.msra.mxu0 0
    %1187 = vmatpush.bf16.msra.mxu0 0
    %1188 = vmatpush.bf16.msra.mxu0 0
    %1189 = vmatpush.bf16.msra.mxu0 %v1176
    %1190 = vmatpush.bf16.msra.mxu0 %v1175
    %1191 = vmatpush.bf16.msra.mxu0 %v1174
    %1192 = vmatpush.bf16.msra.mxu0 %v1173
    %1193 = vmatmul.bf16.gmra.mxu0 %v1183
    %v1194 = vpop.f32.mrf.mxu0
    %v1195 = vadd.f32 0.0, %v1194
    %v1196 = vpop.f32.mrf.mxu0
    %v1197 = vadd.f32 0.0, %v1196
    %1198 = vdwg.mxu0
    %v1207 = vunpack.c.l.b16 %v1140
    %v1208 = vunpack.c.l.b16 %v1141
    %v1209 = vunpack.c.l.b16 %v1142
    %v1210 = vunpack.c.l.b16 %v1143
    %v1211 = vunpack.c.l.b16 %v1144
    %v1212 = vunpack.c.l.b16 %v1145
    %v1213 = vunpack.c.l.b16 %v1146
    %v1214 = vunpack.c.l.b16 %v1147
    %v1215 = vpack.c.b16 %v1208, %v1207
    %v1216 = vpack.c.b16 %v1210, %v1209
    %v1217 = vpack.c.b16 %v1212, %v1211
    %v1218 = vpack.c.b16 %v1214, %v1213
    %v1224 = vsel %vm1181, %v1114, 0
    %1226 = vmatpush.bf16.msra.mxu0 0
    %1227 = vmatpush.bf16.msra.mxu0 0
    %1228 = vmatpush.bf16.msra.mxu0 0
    %1229 = vmatpush.bf16.msra.mxu0 0
    %1230 = vmatpush.bf16.msra.mxu0 %v1218
    %1231 = vmatpush.bf16.msra.mxu0 %v1217
    %1232 = vmatpush.bf16.msra.mxu0 %v1216
    %1233 = vmatpush.bf16.msra.mxu0 %v1215
    %1234 = vmatmul.bf16.gmra.mxu0 %v1224
    %v1235 = vpop.f32.mrf.mxu0
    %v1236 = vadd.f32 %v1195, %v1235
    %v1237 = vpop.f32.mrf.mxu0
    %v1238 = vadd.f32 %v1197, %v1237
    %1239 = vdwg.mxu0
    %s1240 = scalar_lea.vmem %s11, 64
    %v1241 = vld [vmem:[%s1240] sm:$0xf]
    %v1242 = vld [vmem:[%s1240 + $0x4] sm:$0xf]
    %v1243 = vld [vmem:[%s1240 + $0x8] sm:$0xf]
    %v1244 = vld [vmem:[%s1240 + $0xc] sm:$0xf]
    %v1245 = vld [vmem:[%s1240 + $0x10] sm:$0xf]
    %v1246 = vld [vmem:[%s1240 + $0x14] sm:$0xf]
    %v1247 = vld [vmem:[%s1240 + $0x18] sm:$0xf]
    %v1248 = vld [vmem:[%s1240 + $0x1c] sm:$0xf]
    %v1257 = vunpack.c.l.b16 %v1241
    %v1258 = vunpack.c.l.b16 %v1242
    %v1259 = vunpack.c.l.b16 %v1243
    %v1260 = vunpack.c.l.b16 %v1244
    %v1261 = vunpack.c.l.b16 %v1245
    %v1262 = vunpack.c.l.b16 %v1246
    %v1263 = vunpack.c.l.b16 %v1247
    %v1264 = vunpack.c.l.b16 %v1248
    %v1265 = vpack.c.b16 %v1258, %v1257
    %v1266 = vpack.c.b16 %v1260, %v1259
    %v1267 = vpack.c.b16 %v1262, %v1261
    %v1268 = vpack.c.b16 %v1264, %v1263
    %v1274 = vsel %vm1181, %v1139, 0
    %1276 = vmatpush.bf16.msra.mxu0 0
    %1277 = vmatpush.bf16.msra.mxu0 0
    %1278 = vmatpush.bf16.msra.mxu0 0
    %1279 = vmatpush.bf16.msra.mxu0 0
    %1280 = vmatpush.bf16.msra.mxu0 %v1268
    %1281 = vmatpush.bf16.msra.mxu0 %v1267
    %1282 = vmatpush.bf16.msra.mxu0 %v1266
    %1283 = vmatpush.bf16.msra.mxu0 %v1265
    %1284 = vmatmul.bf16.gmra.mxu0 %v1274
    %v1285 = vpop.f32.mrf.mxu0
    %v1286 = vadd.f32 0.0, %v1285
    %v1287 = vpop.f32.mrf.mxu0
    %v1288 = vadd.f32 0.0, %v1287
    %1289 = vdwg.mxu0
    %v1290 = vadd.f32 %v1236, %v1286
    %v1291 = vadd.f32 %v1238, %v1288
    %v1292 = vld [vmem:[#allocation16] sm:$0x1]
    %v1294 = vperm.slane %v1292, 0
    %v1296 = vadd.f32 %v1290, %v1294
    %v1297 = vadd.f32 %v1291, %v1294
    %v1298 = vmax.f32 %v1296, 0.0
    %v1299 = vmax.f32 %v1297, 0.0
    %v1300 = vpack.c.bf16 %v1299, %v1298
    %v1301 = vld [vmem:[#allocation23] sm:$0xf]
    %v1302 = vld [vmem:[#allocation23 + $0x4] sm:$0xf]
    %v1305 = vunpack.c.l.b16 %v1301
    %v1306 = vunpack.c.l.b16 %v1302
    %v1307 = vpack.c.b16 %v1306, %v1305
    %v1309 = vsel %vm1096, %v1307, 0
    %1311 = vmatpush.bf16.msra.mxu0 0
    %1312 = vmatpush.bf16.msra.mxu0 0
    %1313 = vmatpush.bf16.msra.mxu0 0
    %1314 = vmatpush.bf16.msra.mxu0 0
    %1315 = vmatpush.bf16.msra.mxu0 0
    %1316 = vmatpush.bf16.msra.mxu0 0
    %1317 = vmatpush.bf16.msra.mxu0 0
    %1318 = vmatpush.bf16.msra.mxu0 %v1300
    %1319 = vmatmul.bf16.gmra.mxu0 %v1309
    %v1320 = vpop.f32.mrf.mxu0
    %v1321 = vadd.f32 0.0, %v1320
    %v1322 = vpop.f32.mrf.mxu0
    %v1323 = vadd.f32 0.0, %v1322
    %1324 = vdwg.mxu0
    %v1325 = vpack.c.bf16 %v1323, %v1321
    %v1326 = vld [vmem:[%s18] sm:$0xf]
    %v1327 = vld [vmem:[%s18 + $0x4] sm:$0xf]
    %v1330 = vunpack.c.l.b16 %v1326
    %v1331 = vunpack.c.l.b16 %v1327
    %v1332 = vpack.c.b16 %v1331, %v1330
    %v1334 = vsel %vm1096, %v1332, 0
    %1336 = vmatpush.bf16.msra.mxu0 0
    %1337 = vmatpush.bf16.msra.mxu0 0
    %1338 = vmatpush.bf16.msra.mxu0 0
    %1339 = vmatpush.bf16.msra.mxu0 0
    %1340 = vmatpush.bf16.msra.mxu0 0
    %1341 = vmatpush.bf16.msra.mxu0 0
    %1342 = vmatpush.bf16.msra.mxu0 0
    %1343 = vmatpush.bf16.msra.mxu0 %v1300
    %1344 = vmatmul.bf16.gmra.mxu0 %v1334
    %v1345 = vpop.f32.mrf.mxu0
    %v1346 = vadd.f32 0.0, %v1345
    %v1347 = vpop.f32.mrf.mxu0
    %v1348 = vadd.f32 0.0, %v1347
    %1349 = vdwg.mxu0
    %v1350 = vpack.c.bf16 %v1348, %v1346
    %v1351 = vld [vmem:[#allocation20] sm:$0xf]
    %v1352 = vld [vmem:[#allocation20 + $0x4] sm:$0xf]
    %v1353 = vld [vmem:[#allocation20 + $0x8] sm:$0xf]
    %v1354 = vld [vmem:[#allocation20 + $0xc] sm:$0xf]
    %v1355 = vld [vmem:[#allocation20 + $0x10] sm:$0xf]
    %v1356 = vld [vmem:[#allocation20 + $0x14] sm:$0xf]
    %v1357 = vld [vmem:[#allocation20 + $0x18] sm:$0xf]
    %v1358 = vld [vmem:[#allocation20 + $0x1c] sm:$0xf]
    %v1359 = vld [vmem:[#allocation20 + $0x20] sm:$0xf]
    %v1360 = vld [vmem:[#allocation20 + $0x24] sm:$0xf]
    %v1361 = vld [vmem:[#allocation20 + $0x28] sm:$0xf]
    %v1362 = vld [vmem:[#allocation20 + $0x2c] sm:$0xf]
    %v1363 = vld [vmem:[#allocation20 + $0x30] sm:$0xf]
    %v1364 = vld [vmem:[#allocation20 + $0x34] sm:$0xf]
    %v1365 = vld [vmem:[#allocation20 + $0x38] sm:$0xf]
    %v1366 = vld [vmem:[#allocation20 + $0x3c] sm:$0xf]
    %s1367 = scalar_lea.vmem [#allocation20], 64
    %v1368 = vld [vmem:[%s1367] sm:$0xf]
    %v1369 = vld [vmem:[%s1367 + $0x4] sm:$0xf]
    %v1370 = vld [vmem:[%s1367 + $0x8] sm:$0xf]
    %v1371 = vld [vmem:[%s1367 + $0xc] sm:$0xf]
    %v1372 = vld [vmem:[%s1367 + $0x10] sm:$0xf]
    %v1373 = vld [vmem:[%s1367 + $0x14] sm:$0xf]
    %v1374 = vld [vmem:[%s1367 + $0x18] sm:$0xf]
    %v1375 = vld [vmem:[%s1367 + $0x1c] sm:$0xf]
    %v1376 = vld [vmem:[%s1367 + $0x20] sm:$0xf]
    %v1377 = vld [vmem:[%s1367 + $0x24] sm:$0xf]
    %v1378 = vld [vmem:[%s1367 + $0x28] sm:$0xf]
    %v1379 = vld [vmem:[%s1367 + $0x2c] sm:$0xf]
    %v1380 = vld [vmem:[%s1367 + $0x30] sm:$0xf]
    %v1381 = vld [vmem:[%s1367 + $0x34] sm:$0xf]
    %v1382 = vld [vmem:[%s1367 + $0x38] sm:$0xf]
    %v1383 = vld [vmem:[%s1367 + $0x3c] sm:$0xf]
    %v1400 = vunpack.c.l.b16 %v1368
    %v1401 = vunpack.c.l.b16 %v1369
    %v1402 = vunpack.c.l.b16 %v1370
    %v1403 = vunpack.c.l.b16 %v1371
    %v1404 = vunpack.c.l.b16 %v1372
    %v1405 = vunpack.c.l.b16 %v1373
    %v1406 = vunpack.c.l.b16 %v1374
    %v1407 = vunpack.c.l.b16 %v1375
    %v1408 = vunpack.c.l.b16 %v1376
    %v1409 = vunpack.c.l.b16 %v1377
    %v1410 = vunpack.c.l.b16 %v1378
    %v1411 = vunpack.c.l.b16 %v1379
    %v1412 = vunpack.c.l.b16 %v1380
    %v1413 = vunpack.c.l.b16 %v1381
    %v1414 = vunpack.c.l.b16 %v1382
    %v1415 = vunpack.c.l.b16 %v1383
    %v1416 = vpack.c.b16 %v1401, %v1400
    %v1417 = vpack.c.b16 %v1403, %v1402
    %v1418 = vpack.c.b16 %v1405, %v1404
    %v1419 = vpack.c.b16 %v1407, %v1406
    %v1420 = vpack.c.b16 %v1409, %v1408
    %v1421 = vpack.c.b16 %v1411, %v1410
    %v1422 = vpack.c.b16 %v1413, %v1412
    %v1423 = vpack.c.b16 %v1415, %v1414
    %1432 = vmatpush.bf16.msra.mxu0 %v1423
    %1433 = vmatpush.bf16.msra.mxu0 %v1422
    %1434 = vmatpush.bf16.msra.mxu0 %v1421
    %1435 = vmatpush.bf16.msra.mxu0 %v1420
    %1436 = vmatpush.bf16.msra.mxu0 %v1419
    %1437 = vmatpush.bf16.msra.mxu0 %v1418
    %1438 = vmatpush.bf16.msra.mxu0 %v1417
    %1439 = vmatpush.bf16.msra.mxu0 %v1416
    %1440 = vmatmul.bf16.gmra.mxu0 %v1300
    %v1441 = vpop.f32.mrf.mxu0
    %v1442 = vadd.f32 0.0, %v1441
    %v1443 = vpop.f32.mrf.mxu0
    %v1444 = vadd.f32 0.0, %v1443
    %1445 = vdwg.mxu0
    %v1462 = vunpack.c.l.b16 %v1351
    %v1463 = vunpack.c.l.b16 %v1352
    %v1464 = vunpack.c.l.b16 %v1353
    %v1465 = vunpack.c.l.b16 %v1354
    %v1466 = vunpack.c.l.b16 %v1355
    %v1467 = vunpack.c.l.b16 %v1356
    %v1468 = vunpack.c.l.b16 %v1357
    %v1469 = vunpack.c.l.b16 %v1358
    %v1470 = vunpack.c.l.b16 %v1359
    %v1471 = vunpack.c.l.b16 %v1360
    %v1472 = vunpack.c.l.b16 %v1361
    %v1473 = vunpack.c.l.b16 %v1362
    %v1474 = vunpack.c.l.b16 %v1363
    %v1475 = vunpack.c.l.b16 %v1364
    %v1476 = vunpack.c.l.b16 %v1365
    %v1477 = vunpack.c.l.b16 %v1366
    %v1478 = vpack.c.b16 %v1463, %v1462
    %v1479 = vpack.c.b16 %v1465, %v1464
    %v1480 = vpack.c.b16 %v1467, %v1466
    %v1481 = vpack.c.b16 %v1469, %v1468
    %v1482 = vpack.c.b16 %v1471, %v1470
    %v1483 = vpack.c.b16 %v1473, %v1472
    %v1484 = vpack.c.b16 %v1475, %v1474
    %v1485 = vpack.c.b16 %v1477, %v1476
    %1494 = vmatpush.bf16.msra.mxu0 %v1485
    %1495 = vmatpush.bf16.msra.mxu0 %v1484
    %1496 = vmatpush.bf16.msra.mxu0 %v1483
    %1497 = vmatpush.bf16.msra.mxu0 %v1482
    %1498 = vmatpush.bf16.msra.mxu0 %v1481
    %1499 = vmatpush.bf16.msra.mxu0 %v1480
    %1500 = vmatpush.bf16.msra.mxu0 %v1479
    %1501 = vmatpush.bf16.msra.mxu0 %v1478
    %1502 = vmatmul.bf16.gmra.mxu0 %v1325
    %v1503 = vpop.f32.mrf.mxu0
    %v1504 = vadd.f32 %v1442, %v1503
    %v1505 = vpop.f32.mrf.mxu0
    %v1506 = vadd.f32 %v1444, %v1505
    %1507 = vdwg.mxu0
    %s1508 = scalar_lea.vmem [#allocation20], 128
    %v1509 = vld [vmem:[%s1508] sm:$0xf]
    %v1510 = vld [vmem:[%s1508 + $0x4] sm:$0xf]
    %v1511 = vld [vmem:[%s1508 + $0x8] sm:$0xf]
    %v1512 = vld [vmem:[%s1508 + $0xc] sm:$0xf]
    %v1513 = vld [vmem:[%s1508 + $0x10] sm:$0xf]
    %v1514 = vld [vmem:[%s1508 + $0x14] sm:$0xf]
    %v1515 = vld [vmem:[%s1508 + $0x18] sm:$0xf]
    %v1516 = vld [vmem:[%s1508 + $0x1c] sm:$0xf]
    %v1517 = vld [vmem:[%s1508 + $0x20] sm:$0xf]
    %v1518 = vld [vmem:[%s1508 + $0x24] sm:$0xf]
    %v1519 = vld [vmem:[%s1508 + $0x28] sm:$0xf]
    %v1520 = vld [vmem:[%s1508 + $0x2c] sm:$0xf]
    %v1521 = vld [vmem:[%s1508 + $0x30] sm:$0xf]
    %v1522 = vld [vmem:[%s1508 + $0x34] sm:$0xf]
    %v1523 = vld [vmem:[%s1508 + $0x38] sm:$0xf]
    %v1524 = vld [vmem:[%s1508 + $0x3c] sm:$0xf]
    %v1541 = vunpack.c.l.b16 %v1509
    %v1542 = vunpack.c.l.b16 %v1510
    %v1543 = vunpack.c.l.b16 %v1511
    %v1544 = vunpack.c.l.b16 %v1512
    %v1545 = vunpack.c.l.b16 %v1513
    %v1546 = vunpack.c.l.b16 %v1514
    %v1547 = vunpack.c.l.b16 %v1515
    %v1548 = vunpack.c.l.b16 %v1516
    %v1549 = vunpack.c.l.b16 %v1517
    %v1550 = vunpack.c.l.b16 %v1518
    %v1551 = vunpack.c.l.b16 %v1519
    %v1552 = vunpack.c.l.b16 %v1520
    %v1553 = vunpack.c.l.b16 %v1521
    %v1554 = vunpack.c.l.b16 %v1522
    %v1555 = vunpack.c.l.b16 %v1523
    %v1556 = vunpack.c.l.b16 %v1524
    %v1557 = vpack.c.b16 %v1542, %v1541
    %v1558 = vpack.c.b16 %v1544, %v1543
    %v1559 = vpack.c.b16 %v1546, %v1545
    %v1560 = vpack.c.b16 %v1548, %v1547
    %v1561 = vpack.c.b16 %v1550, %v1549
    %v1562 = vpack.c.b16 %v1552, %v1551
    %v1563 = vpack.c.b16 %v1554, %v1553
    %v1564 = vpack.c.b16 %v1556, %v1555
    %1573 = vmatpush.bf16.msra.mxu0 %v1564
    %1574 = vmatpush.bf16.msra.mxu0 %v1563
    %1575 = vmatpush.bf16.msra.mxu0 %v1562
    %1576 = vmatpush.bf16.msra.mxu0 %v1561
    %1577 = vmatpush.bf16.msra.mxu0 %v1560
    %1578 = vmatpush.bf16.msra.mxu0 %v1559
    %1579 = vmatpush.bf16.msra.mxu0 %v1558
    %1580 = vmatpush.bf16.msra.mxu0 %v1557
    %1581 = vmatmul.bf16.gmra.mxu0 %v1350
    %v1582 = vpop.f32.mrf.mxu0
    %v1583 = vadd.f32 0.0, %v1582
    %v1584 = vpop.f32.mrf.mxu0
    %v1585 = vadd.f32 0.0, %v1584
    %1586 = vdwg.mxu0
    %v1587 = vadd.f32 %v1504, %v1583
    %v1588 = vadd.f32 %v1506, %v1585
    %v1589 = vld [vmem:[#allocation22] sm:$0x1]
    %v1591 = vperm.slane %v1589, 0
    %v1593 = vadd.f32 %v1587, %v1591
    %v1594 = vadd.f32 %v1588, %v1591
    %v1595 = vmax.f32 %v1593, 0.0
    %v1596 = vmax.f32 %v1594, 0.0
    %1597 = vst [vmem:[#allocation25] sm:$0xff] %v1595
    %1598 = vst [vmem:[#allocation25 + $0x8] sm:$0xff] %v1596
    // Predicated region
    $region134: #{tpu_custom_call.1} parent=1 // pred_check
      _
    $region135: #{tpu_custom_call.1} parent=1 // pred_check_branch
      %1600 = sbr.rel (0) target = $region137
    $region136: #{tpu_custom_call.1} parent=1 // pred_region
      %1602 = vsyncadd [#allocation4], 0
      %s1603 = sshll.u32 [#allocation25], 4
      %s1604 = int_to_ptr.vmem [resolvable:$true] %s1603
      %s1605 = sshll.u32 %s19, 4
      %s1606 = int_to_ptr.hbm [resolvable:$true] %s1605
      %1611 = dma.vmem_to_hbm [thread:$0]  %s1604, 256, %s1606, [#allocation4], 128, 128, 8
    $region137: #{tpu_custom_call.1} parent=1 // pred_fallthru
      _
    // Predicated region
    $region138: #{tpu_custom_call.1} parent=1 // pred_check
      _
    $region139: #{tpu_custom_call.1} parent=1 // pred_check_branch
      %1613 = sbr.rel (0) target = $region141
    $region140: #{tpu_custom_call.1} parent=1 // pred_region
      %1615 = dma.done [#allocation4], 256
    $region141: #{tpu_custom_call.1} parent=1 // pred_fallthru
      _
    %1616 = vsyncpa [#allocation3], 1
    %1617 = vsyncpa [#allocation6], 1
    %1618 = vsyncpa [#allocation9], 1
    %1619 = vsyncpa [#allocation12], 1
    %1620 = vsyncpa [#allocation15], 1
    %1621 = vsyncpa [#allocation18], 1
    %1622 = vsyncpa [#allocation21], 1
    %1623 = vsyncpa [#allocation24], 1
    %1624 = vsyncpa [#allocation4], 1

</llo_original>
